<compile_context>
chip_gen: v7x
topology: tpu7x:2x2x1
jax: 0.10.0
libtpu: 0.0.40
codegen_flags: <defaults>
</compile_context>

<pallas_src>
import functools

import jax
import jax.numpy as jnp
from jax.experimental import pallas as pl
from jax.experimental.pallas import tpu as pltpu

EPS = 1e-5  # PyTorch BatchNorm1d default eps


# ---------------------------------------------------------------------------
# Kernel
# ---------------------------------------------------------------------------
def aggregate_kernel(
    dense,                                   # static python bool: dense (F/4 % 128 == 0) layout
    x_ref,
    wsh_ref, wc_ref, ba_ref, gd_ref, bed_ref,    # shifted-tap weights, fused center weight, bias, branch BN
    wgtp_ref, bgtp_ref,                          # non-local theta/phi/g 1x1 convs
    wnl_ref, bnl_ref, gnl_ref, benl_ref,         # non-local W conv + its BN
    w5_ref, b5_ref, g5_ref, be5_ref,             # conv_5 taps + BN
    out_ref,
):
    x = x_ref[...]                           # (B, T, F) f32
    B, T, F = x.shape
    F4 = F // 4
    F8 = max(F4 // 2, 1)
    BT = B * T
    bf16 = jnp.bfloat16

    relu = lambda v: jnp.maximum(v, 0.0)

    def mm(a2, w):                           # bf16 MXU matmul, f32 accumulation
        return jnp.dot(a2.astype(bf16), w, preferred_element_type=jnp.float32)

    def moments(a2):                         # one-pass per-channel training-mode BN stats (f32)
        n = jnp.float32(a2.shape[0])
        s1 = jnp.sum(a2, axis=0, keepdims=True)
        s2 = jnp.sum(a2 * a2, axis=0, keepdims=True)
        mean = s1 / n
        var = jnp.maximum(s2 / n - mean * mean, 0.0)   # guard f32 cancellation
        return mean, jax.lax.rsqrt(var + EPS)

    # hoisted time iota, shared by every zero-padded time shift
    t_idx = jax.lax.broadcasted_iota(jnp.int32, (1, T, 1), 1)

    def shift(a, s):
        # out[:, t, :] = a[:, t - s, :] with zeros outside [0, T).
        # |s| < T is a HARD correctness requirement (asserted in the wrapper).
        rolled = pltpu.roll(a, shift=s % T, axis=1)
        mask = (t_idx >= s) if s > 0 else (t_idx < T + s)
        return jnp.where(mask, rolled, 0.0)

    x2 = x.reshape(BT, F)

    # ---- conv_1/2/3 (k=3, dil 1/2/4) + conv_4 (1x1): tap-accumulated matmuls ------
    # Center taps of all four convs form one dense (F, F) weight; the 6 shifted taps
    # are accumulated one matmul each -> no (B,T,7F) intermediate is ever built.
    a2 = mm(x2, wc_ref[...]) + ba_ref[...]                     # (BT, F)
    shifts = (1, -1, 2, -2, 4, -4)                             # (branch, tap) order

    if dense:
        # Dense per-tap (F, F4) weights; branch outputs concat lane-aligned (F4 % 128 == 0).
        parts = []
        for bi in range(3):
            sp = shift(x, shifts[2 * bi]).reshape(BT, F)
            sm = shift(x, shifts[2 * bi + 1]).reshape(BT, F)
            parts.append(mm(sp, wsh_ref[2 * bi]) + mm(sm, wsh_ref[2 * bi + 1]))
        a_br = relu(a2[:, :3 * F4] + jnp.concatenate(parts, axis=-1))   # branches (BT, 3F4)
        a_4 = relu(a2[:, 3 * F4:])                                      # conv_4 (no BN)
        mean, inv = moments(a_br)
        feat_br = (a_br - mean) * (inv * gd_ref[...]) + bed_ref[...]
        nl_in = a_4
    else:
        # F4 < 128: keep zero-padded full-F-lane tap weights (lane-dense accumulation).
        for i in range(6):
            a2 = a2 + mm(shift(x, shifts[i]).reshape(BT, F), wsh_ref[i])
        a2 = relu(a2)
        mean, inv = moments(a2)              # per-channel stats -> exact for every channel
        lane = jax.lax.broadcasted_iota(jnp.int32, (1, F), 1)
        is_branch = lane < 3 * F4
        gd = gd_ref[...]
        scale = jnp.where(is_branch, gd * inv, 1.0)            # identity BN on conv_4 lanes
        offs = jnp.where(is_branch, bed_ref[...] - mean * gd * inv, 0.0)
        feat2 = a2 * scale + offs            # [BN(out1)|BN(out2)|BN(out3)|relu(conv4)]
        nl_in = feat2

    # ---- NONLocalBlock1D(F4, sub_sample=False, bn_layer=True) ---------------------
    if dense:
        th = (mm(nl_in, wgtp_ref[0]) + bgtp_ref[0]).reshape(B, T, F8)
        ph = (mm(nl_in, wgtp_ref[1]) + bgtp_ref[1]).reshape(B, T, F8)
        gx = (mm(nl_in, wgtp_ref[2]) + bgtp_ref[2]).reshape(B, T, F8)
    else:
        gtp = (mm(nl_in, wgtp_ref[...]) + bgtp_ref[...]).reshape(B, T, 3 * F8)
        th = gtp[..., 0:F8]
        ph = gtp[..., F8:2 * F8]
        gx = gtp[..., 2 * F8:]
    th = (th * (1.0 / T)).astype(bf16)       # fold f/N (N == T) into theta
    ph = ph.astype(bf16)
    gx = gx.astype(bf16)
    f = jnp.einsum('btc,bsc->bts', th, ph, preferred_element_type=jnp.float32)
    y = jnp.einsum('bts,bsc->btc', f.astype(bf16), gx, preferred_element_type=jnp.float32)
    wy = mm(y.reshape(BT, F8), wnl_ref[...]) + bnl_ref[...]
    mean_n, inv_n = moments(wy)
    wy = (wy - mean_n) * (inv_n * gnl_ref[...]) + benl_ref[...]

    if dense:
        z = wy + nl_in                                           # non-local residual (F4 chans)
        cat = jnp.concatenate([feat_br, z], axis=-1).reshape(B, T, F)
    else:
        # force the padded (branch) lanes of W_y's BN output to exactly zero so the
        # result does not depend on the gamma/beta padding convention.
        wy = jnp.where(lane >= 3 * F4, wy, 0.0)
        cat = (feat2 + wy).reshape(B, T, F)                      # [out_d | z]

    # ---- conv_5 (k=3, pad=1): tap-accumulated matmuls -> ReLU -> BN ----------------
    o5 = mm(shift(cat, 1).reshape(BT, F), w5_ref[0])
    o5 = o5 + mm(cat.reshape(BT, F), w5_ref[1])
    o5 = o5 + mm(shift(cat, -1).reshape(BT, F), w5_ref[2])
    o5 = relu(o5 + b5_ref[...])
    mean5, inv5 = moments(o5)
    o5 = (o5 - mean5) * (inv5 * g5_ref[...]) + be5_ref[...]

    # residual add; output stays (B, T, F) (== PyTorch's final permute back)
    out_ref[...] = (o5.reshape(B, T, F) + x).astype(out_ref.dtype)


# ---------------------------------------------------------------------------
# Wrapper
# ---------------------------------------------------------------------------
def _full_spec(shape):
    nd = len(shape)
    return pl.BlockSpec(shape, lambda i, _nd=nd: (0,) * _nd)


def _vmem_limit_bytes():
    # Generation-aware VMEM request: ~75% of physical VMEM (leave headroom for compiler
    # scratch) -> ~96 MiB on v5e/v6e (128 MiB), ~48 MiB on v7x (64 MiB).
    cap = 128 * 1024 * 1024
    try:
        info = pltpu.get_tpu_info()
        for name in ("vmem_capacity_bytes", "vmem_bytes", "vmem_size_bytes"):
            v = getattr(info, name, None)
            if v:
                cap = int(v)
                break
    except Exception:
        pass
    return max(32 * 1024 * 1024, (cap * 3) // 4)


@jax.jit
def aggregate_forward(x, params):
    B, T, F = x.shape
    assert T > 4, "time shifts of up to 4 require T > 4 (hard correctness requirement)"
    assert F % 8 == 0, "len_feature must be divisible by 8"
    dense = ((F // 4) % 128 == 0)            # lane-aligned branch width -> dense weights
    kernel = functools.partial(aggregate_kernel, dense)
    args = [x] + list(params)
    return pl.pallas_call(
        kernel,
        grid=(1,),
        in_specs=[_full_spec(a.shape) for a in args],
        out_specs=_full_spec((B, T, F)),
        out_shape=jax.ShapeDtypeStruct((B, T, F), jnp.float32),
        compiler_params=pltpu.CompilerParams(
            dimension_semantics=("arbitrary",),
            vmem_limit_bytes=_vmem_limit_bytes(),
        ),
    )(*args)


# ---------------------------------------------------------------------------
# Parameter init (PyTorch layouts) + packing into the kernel's fused weights
# ---------------------------------------------------------------------------
def init_params(key, F):
    F4 = F // 4
    F8 = max(F4 // 2, 1)                     # NonLocal inter_channels
    dense = (F4 % 128 == 0)
    bf16 = jnp.bfloat16
    keys = jax.random.split(key, 9)

    def conv_pt(k, cout, cin, ksz):
        # PyTorch Conv1d weight layout (Cout, Cin, K), kaiming-uniform-ish bounds.
        kw, kb = jax.random.split(k)
        bound = 1.0 / (cin * ksz) ** 0.5
        w = jax.random.uniform(kw, (cout, cin, ksz), jnp.float32, -bound, bound)
        b = jax.random.uniform(kb, (cout,), jnp.float32, -bound, bound)
        return w, b

    w1, b1 = conv_pt(keys[0], F4, F, 3)      # conv_1 (dil 1)
    w2, b2 = conv_pt(keys[1], F4, F, 3)      # conv_2 (dil 2)
    w3, b3 = conv_pt(keys[2], F4, F, 3)      # conv_3 (dil 4)
    w4, b4 = conv_pt(keys[3], F4, F, 1)      # conv_4 (1x1)
    tw, tb = conv_pt(keys[4], F8, F4, 1)     # non-local theta
    pw, pb = conv_pt(keys[5], F8, F4, 1)     # non-local phi
    gw, gb = conv_pt(keys[6], F8, F4, 1)     # non-local g
    nw, nb = conv_pt(keys[7], F4, F8, 1)     # non-local W conv
    w5, b5 = conv_pt(keys[8], F, F, 3)       # conv_5

    # BatchNorm affine params (PyTorch defaults; non-local W BN is init'd to zero)
    bn_d_gamma = jnp.ones((3 * F4,), jnp.float32)
    bn_d_beta = jnp.zeros((3 * F4,), jnp.float32)
    nl_gamma = jnp.zeros((F4,), jnp.float32)
    nl_beta = jnp.zeros((F4,), jnp.float32)
    bn5_gamma = jnp.ones((F,), jnp.float32)
    bn5_beta = jnp.zeros((F,), jnp.float32)

    # center taps of conv_1/2/3 + conv_4 (1x1) as ONE dense (F, F) weight
    wc = jnp.concatenate(
        [w1[:, :, 1].T, w2[:, :, 1].T, w3[:, :, 1].T, w4[:, :, 0].T], axis=1
    ).astype(bf16)
    ba = jnp.concatenate([b1, b2, b3, b4]).reshape(1, F)

    # shifted taps: order matches kernel shifts (1, -1, 2, -2, 4, -4)
    taps = [(w1, 0), (w1, 2), (w2, 0), (w2, 2), (w3, 0), (w3, 2)]
    if dense:
        wsh = jnp.stack([w[:, :, k].T for (w, k) in taps]).astype(bf16)      # (6, F, F4)
        gd = bn_d_gamma.reshape(1, 3 * F4)
        bed = bn_d_beta.reshape(1, 3 * F4)
        wgtp = jnp.stack([tw[:, :, 0].T, pw[:, :, 0].T, gw[:, :, 0].T]).astype(bf16)  # (3, F4, F8)
        bgtp = jnp.stack([tb, pb, gb]).reshape(3, 1, F8)
        wnl = nw[:, :, 0].T.astype(bf16)                                     # (F8, F4)
        bnl = nb.reshape(1, F4)
        gnl = nl_gamma.reshape(1, F4)
        benl = nl_beta.reshape(1, F4)
    else:
        # small-F regime: zero-pad per-tap weights to full F output lanes (lane-dense)
        wsh = jnp.zeros((6, F, F), jnp.float32)
        for i, (w, k) in enumerate(taps):
            c0 = (i // 2) * F4
            wsh = wsh.at[i, :, c0:c0 + F4].set(w[:, :, k].T)
        wsh = wsh.astype(bf16)
        gd = jnp.concatenate([bn_d_gamma, jnp.ones((F4,), jnp.float32)]).reshape(1, F)
        bed = jnp.concatenate([bn_d_beta, jnp.zeros((F4,), jnp.float32)]).reshape(1, F)
        wgtp = jnp.zeros((F, 3 * F8), jnp.float32)
        wgtp = wgtp.at[3 * F4:, 0:F8].set(tw[:, :, 0].T)
        wgtp = wgtp.at[3 * F4:, F8:2 * F8].set(pw[:, :, 0].T)
        wgtp = wgtp.at[3 * F4:, 2 * F8:].set(gw[:, :, 0].T)
        wgtp = wgtp.astype(bf16)
        bgtp = jnp.concatenate([tb, pb, gb]).reshape(1, 3 * F8)
        wnl = jnp.zeros((F8, F), jnp.float32).at[:, 3 * F4:].set(nw[:, :, 0].T).astype(bf16)
        bnl = jnp.zeros((1, F), jnp.float32).at[:, 3 * F4:].set(nb.reshape(1, F4))
        gnl = jnp.zeros((1, F), jnp.float32).at[:, 3 * F4:].set(nl_gamma.reshape(1, F4))
        benl = jnp.zeros((1, F), jnp.float32).at[:, 3 * F4:].set(nl_beta.reshape(1, F4))

    # conv_5 taps stacked (3, F, F): [k=0 | k=1 | k=2] matched with shifts (+1, 0, -1)
    w5s = jnp.stack([w5[:, :, 0].T, w5[:, :, 1].T, w5[:, :, 2].T]).astype(bf16)
    b5f = b5.reshape(1, F)
    g5 = bn5_gamma.reshape(1, F)
    be5 = bn5_beta.reshape(1, F)

    return [wsh, wc, ba, gd, bed, wgtp, bgtp, wnl, bnl, gnl, benl, w5s, b5f, g5, be5]


if __name__ == "__main__":
    key = jax.random.PRNGKey(0)
    kx, kp, kx2, kp2 = jax.random.split(key, 4)

    # small padded-layout case (F/4 < 128 lanes): zero-padded fused weights
    B, T, F = 2, 16, 32
    x = jax.random.normal(kx, (B, T, F), jnp.float32)
    params = init_params(kp, F)
    out = aggregate_forward(x, params)
    jax.block_until_ready(out)
    assert out.shape == (B, T, F)
    assert bool(jnp.all(jnp.isfinite(out)))

    # dense-layout case (F/4 is a multiple of 128): no zero-padded weight blocks
    B2, T2, F2 = 2, 16, 512
    x2 = jax.random.normal(kx2, (B2, T2, F2), jnp.float32)
    params2 = init_params(kp2, F2)
    out2 = aggregate_forward(x2, params2)
    jax.block_until_ready(out2)
    assert out2.shape == (B2, T2, F2)
    assert bool(jnp.all(jnp.isfinite(out2)))

    print("KERNEL_OK")
</pallas_src>

<mosaic_0001>
module attributes {stable_mosaic.version = 11 : i64} {
  func.func @aggregate_kernel(%arg0: i32, %arg1: memref<2x16x32xf32, #tpu.memory_space<vmem>>, %arg2: memref<6x32x32xbf16, #tpu.memory_space<vmem>>, %arg3: memref<32x32xbf16, #tpu.memory_space<vmem>>, %arg4: memref<1x32xf32, #tpu.memory_space<vmem>>, %arg5: memref<1x32xf32, #tpu.memory_space<vmem>>, %arg6: memref<1x32xf32, #tpu.memory_space<vmem>>, %arg7: memref<32x12xbf16, #tpu.memory_space<vmem>>, %arg8: memref<1x12xf32, #tpu.memory_space<vmem>>, %arg9: memref<4x32xbf16, #tpu.memory_space<vmem>>, %arg10: memref<1x32xf32, #tpu.memory_space<vmem>>, %arg11: memref<1x32xf32, #tpu.memory_space<vmem>>, %arg12: memref<1x32xf32, #tpu.memory_space<vmem>>, %arg13: memref<3x32x32xbf16, #tpu.memory_space<vmem>>, %arg14: memref<1x32xf32, #tpu.memory_space<vmem>>, %arg15: memref<1x32xf32, #tpu.memory_space<vmem>>, %arg16: memref<1x32xf32, #tpu.memory_space<vmem>>, %arg17: memref<2x16x32xf32, #tpu.memory_space<vmem>>) attributes {dimension_semantics = [#tpu.dimension_semantics<arbitrary>], iteration_bounds = array<i64: 1>, scalar_prefetch = 0 : i64, scratch_operands = 0 : i64, tpu.core_type = #tpu.core_type<tc>, window_params = [{pipeline_mode = #tpu.pipeline_mode<synchronous>, transform_indices = @transform_0, window_bounds = array<i64: 2, 16, 32>}, {pipeline_mode = #tpu.pipeline_mode<synchronous>, transform_indices = @transform_1, window_bounds = array<i64: 6, 32, 32>}, {pipeline_mode = #tpu.pipeline_mode<synchronous>, transform_indices = @transform_2, window_bounds = array<i64: 32, 32>}, {pipeline_mode = #tpu.pipeline_mode<synchronous>, transform_indices = @transform_3, window_bounds = array<i64: 1, 32>}, {pipeline_mode = #tpu.pipeline_mode<synchronous>, transform_indices = @transform_4, window_bounds = array<i64: 1, 32>}, {pipeline_mode = #tpu.pipeline_mode<synchronous>, transform_indices = @transform_5, window_bounds = array<i64: 1, 32>}, {pipeline_mode = #tpu.pipeline_mode<synchronous>, transform_indices = @transform_6, window_bounds = array<i64: 32, 12>}, {pipeline_mode = #tpu.pipeline_mode<synchronous>, transform_indices = @transform_7, window_bounds = array<i64: 1, 12>}, {pipeline_mode = #tpu.pipeline_mode<synchronous>, transform_indices = @transform_8, window_bounds = array<i64: 4, 32>}, {pipeline_mode = #tpu.pipeline_mode<synchronous>, transform_indices = @transform_9, window_bounds = array<i64: 1, 32>}, {pipeline_mode = #tpu.pipeline_mode<synchronous>, transform_indices = @transform_10, window_bounds = array<i64: 1, 32>}, {pipeline_mode = #tpu.pipeline_mode<synchronous>, transform_indices = @transform_11, window_bounds = array<i64: 1, 32>}, {pipeline_mode = #tpu.pipeline_mode<synchronous>, transform_indices = @transform_12, window_bounds = array<i64: 3, 32, 32>}, {pipeline_mode = #tpu.pipeline_mode<synchronous>, transform_indices = @transform_13, window_bounds = array<i64: 1, 32>}, {pipeline_mode = #tpu.pipeline_mode<synchronous>, transform_indices = @transform_14, window_bounds = array<i64: 1, 32>}, {pipeline_mode = #tpu.pipeline_mode<synchronous>, transform_indices = @transform_15, window_bounds = array<i64: 1, 32>}, {pipeline_mode = #tpu.pipeline_mode<synchronous>, transform_indices = @transform_16, window_bounds = array<i64: 2, 16, 32>}]} {
    %c0 = arith.constant 0 : index
    %c0_0 = arith.constant 0 : index
    %c0_1 = arith.constant 0 : index
    %0 = vector.load %arg1[%c0, %c0_0, %c0_1] : memref<2x16x32xf32, #tpu.memory_space<vmem>>, vector<2x16x32xf32>
    %1 = tpu.iota {dimensions = array<i32: 1>} : vector<1x16x1xi32>
    %2 = vector.shape_cast %0 : vector<2x16x32xf32> to vector<32x32xf32>
    %c0_2 = arith.constant 0 : index
    %c0_3 = arith.constant 0 : index
    %3 = vector.load %arg3[%c0_2, %c0_3] : memref<32x32xbf16, #tpu.memory_space<vmem>>, vector<32x32xbf16>
    %4 = arith.truncf %2 : vector<32x32xf32> to vector<32x32xbf16>
    %cst = arith.constant dense<0.000000e+00> : vector<32x32xf32>
    %5 = tpu.matmul %4, %3, %cst {dimension_numbers = #tpu.dot_dimension_numbers<[1], [0], [0], [1], [0, 0, 1, 1], [], []>} : vector<32x32xbf16>, vector<32x32xbf16>, vector<32x32xf32> -> vector<32x32xf32>
    %c0_4 = arith.constant 0 : index
    %c0_5 = arith.constant 0 : index
    %6 = vector.load %arg4[%c0_4, %c0_5] : memref<1x32xf32, #tpu.memory_space<vmem>>, vector<1x32xf32>
    %7 = vector.broadcast %6 : vector<1x32xf32> to vector<32x32xf32>
    %8 = arith.addf %5, %7 : vector<32x32xf32>
    %c1_i32 = arith.constant 1 : i32
    %9 = tpu.dynamic_rotate %0 by %c1_i32 dim 1 : vector<2x16x32xf32>, i32 -> vector<2x16x32xf32>
    %c1_i32_6 = arith.constant 1 : i32
    %10 = vector.broadcast %c1_i32_6 : i32 to vector<1x16x1xi32>
    %11 = arith.cmpi sge, %1, %10 : vector<1x16x1xi32>
    %cst_7 = arith.constant 0.000000e+00 : f32
    %12 = vector.shape_cast %11 : vector<1x16x1xi1> to vector<1x16x1xi1>
    %13 = vector.broadcast %12 : vector<1x16x1xi1> to vector<2x16x32xi1>
    %14 = vector.broadcast %cst_7 : f32 to vector<2x16x32xf32>
    %15 = arith.select %13, %9, %14 : vector<2x16x32xi1>, vector<2x16x32xf32>
    %16 = vector.shape_cast %15 : vector<2x16x32xf32> to vector<32x32xf32>
    %c0_8 = arith.constant 0 : index
    %c0_9 = arith.constant 0 : index
    %c0_10 = arith.constant 0 : index
    %17 = vector.load %arg2[%c0_8, %c0_9, %c0_10] : memref<6x32x32xbf16, #tpu.memory_space<vmem>>, vector<1x32x32xbf16>
    %18 = vector.shape_cast %17 : vector<1x32x32xbf16> to vector<32x32xbf16>
    %19 = arith.truncf %16 : vector<32x32xf32> to vector<32x32xbf16>
    %cst_11 = arith.constant dense<0.000000e+00> : vector<32x32xf32>
    %20 = tpu.matmul %19, %18, %cst_11 {dimension_numbers = #tpu.dot_dimension_numbers<[1], [0], [0], [1], [0, 0, 1, 1], [], []>} : vector<32x32xbf16>, vector<32x32xbf16>, vector<32x32xf32> -> vector<32x32xf32>
    %21 = arith.addf %8, %20 : vector<32x32xf32>
    %c15_i32 = arith.constant 15 : i32
    %22 = tpu.dynamic_rotate %0 by %c15_i32 dim 1 : vector<2x16x32xf32>, i32 -> vector<2x16x32xf32>
    %c15_i32_12 = arith.constant 15 : i32
    %23 = vector.broadcast %c15_i32_12 : i32 to vector<1x16x1xi32>
    %24 = arith.cmpi slt, %1, %23 : vector<1x16x1xi32>
    %cst_13 = arith.constant 0.000000e+00 : f32
    %25 = vector.shape_cast %24 : vector<1x16x1xi1> to vector<1x16x1xi1>
    %26 = vector.broadcast %25 : vector<1x16x1xi1> to vector<2x16x32xi1>
    %27 = vector.broadcast %cst_13 : f32 to vector<2x16x32xf32>
    %28 = arith.select %26, %22, %27 : vector<2x16x32xi1>, vector<2x16x32xf32>
    %29 = vector.shape_cast %28 : vector<2x16x32xf32> to vector<32x32xf32>
    %c1 = arith.constant 1 : index
    %c0_14 = arith.constant 0 : index
    %c0_15 = arith.constant 0 : index
    %30 = vector.load %arg2[%c1, %c0_14, %c0_15] : memref<6x32x32xbf16, #tpu.memory_space<vmem>>, vector<1x32x32xbf16>
    %31 = vector.shape_cast %30 : vector<1x32x32xbf16> to vector<32x32xbf16>
    %32 = arith.truncf %29 : vector<32x32xf32> to vector<32x32xbf16>
    %cst_16 = arith.constant dense<0.000000e+00> : vector<32x32xf32>
    %33 = tpu.matmul %32, %31, %cst_16 {dimension_numbers = #tpu.dot_dimension_numbers<[1], [0], [0], [1], [0, 0, 1, 1], [], []>} : vector<32x32xbf16>, vector<32x32xbf16>, vector<32x32xf32> -> vector<32x32xf32>
    %34 = arith.addf %21, %33 : vector<32x32xf32>
    %c2_i32 = arith.constant 2 : i32
    %35 = tpu.dynamic_rotate %0 by %c2_i32 dim 1 : vector<2x16x32xf32>, i32 -> vector<2x16x32xf32>
    %c2_i32_17 = arith.constant 2 : i32
    %36 = vector.broadcast %c2_i32_17 : i32 to vector<1x16x1xi32>
    %37 = arith.cmpi sge, %1, %36 : vector<1x16x1xi32>
    %cst_18 = arith.constant 0.000000e+00 : f32
    %38 = vector.shape_cast %37 : vector<1x16x1xi1> to vector<1x16x1xi1>
    %39 = vector.broadcast %38 : vector<1x16x1xi1> to vector<2x16x32xi1>
    %40 = vector.broadcast %cst_18 : f32 to vector<2x16x32xf32>
    %41 = arith.select %39, %35, %40 : vector<2x16x32xi1>, vector<2x16x32xf32>
    %42 = vector.shape_cast %41 : vector<2x16x32xf32> to vector<32x32xf32>
    %c2 = arith.constant 2 : index
    %c0_19 = arith.constant 0 : index
    %c0_20 = arith.constant 0 : index
    %43 = vector.load %arg2[%c2, %c0_19, %c0_20] : memref<6x32x32xbf16, #tpu.memory_space<vmem>>, vector<1x32x32xbf16>
    %44 = vector.shape_cast %43 : vector<1x32x32xbf16> to vector<32x32xbf16>
    %45 = arith.truncf %42 : vector<32x32xf32> to vector<32x32xbf16>
    %cst_21 = arith.constant dense<0.000000e+00> : vector<32x32xf32>
    %46 = tpu.matmul %45, %44, %cst_21 {dimension_numbers = #tpu.dot_dimension_numbers<[1], [0], [0], [1], [0, 0, 1, 1], [], []>} : vector<32x32xbf16>, vector<32x32xbf16>, vector<32x32xf32> -> vector<32x32xf32>
    %47 = arith.addf %34, %46 : vector<32x32xf32>
    %c14_i32 = arith.constant 14 : i32
    %48 = tpu.dynamic_rotate %0 by %c14_i32 dim 1 : vector<2x16x32xf32>, i32 -> vector<2x16x32xf32>
    %c14_i32_22 = arith.constant 14 : i32
    %49 = vector.broadcast %c14_i32_22 : i32 to vector<1x16x1xi32>
    %50 = arith.cmpi slt, %1, %49 : vector<1x16x1xi32>
    %cst_23 = arith.constant 0.000000e+00 : f32
    %51 = vector.shape_cast %50 : vector<1x16x1xi1> to vector<1x16x1xi1>
    %52 = vector.broadcast %51 : vector<1x16x1xi1> to vector<2x16x32xi1>
    %53 = vector.broadcast %cst_23 : f32 to vector<2x16x32xf32>
    %54 = arith.select %52, %48, %53 : vector<2x16x32xi1>, vector<2x16x32xf32>
    %55 = vector.shape_cast %54 : vector<2x16x32xf32> to vector<32x32xf32>
    %c3 = arith.constant 3 : index
    %c0_24 = arith.constant 0 : index
    %c0_25 = arith.constant 0 : index
    %56 = vector.load %arg2[%c3, %c0_24, %c0_25] : memref<6x32x32xbf16, #tpu.memory_space<vmem>>, vector<1x32x32xbf16>
    %57 = vector.shape_cast %56 : vector<1x32x32xbf16> to vector<32x32xbf16>
    %58 = arith.truncf %55 : vector<32x32xf32> to vector<32x32xbf16>
    %cst_26 = arith.constant dense<0.000000e+00> : vector<32x32xf32>
    %59 = tpu.matmul %58, %57, %cst_26 {dimension_numbers = #tpu.dot_dimension_numbers<[1], [0], [0], [1], [0, 0, 1, 1], [], []>} : vector<32x32xbf16>, vector<32x32xbf16>, vector<32x32xf32> -> vector<32x32xf32>
    %60 = arith.addf %47, %59 : vector<32x32xf32>
    %c4_i32 = arith.constant 4 : i32
    %61 = tpu.dynamic_rotate %0 by %c4_i32 dim 1 : vector<2x16x32xf32>, i32 -> vector<2x16x32xf32>
    %c4_i32_27 = arith.constant 4 : i32
    %62 = vector.broadcast %c4_i32_27 : i32 to vector<1x16x1xi32>
    %63 = arith.cmpi sge, %1, %62 : vector<1x16x1xi32>
    %cst_28 = arith.constant 0.000000e+00 : f32
    %64 = vector.shape_cast %63 : vector<1x16x1xi1> to vector<1x16x1xi1>
    %65 = vector.broadcast %64 : vector<1x16x1xi1> to vector<2x16x32xi1>
    %66 = vector.broadcast %cst_28 : f32 to vector<2x16x32xf32>
    %67 = arith.select %65, %61, %66 : vector<2x16x32xi1>, vector<2x16x32xf32>
    %68 = vector.shape_cast %67 : vector<2x16x32xf32> to vector<32x32xf32>
    %c4 = arith.constant 4 : index
    %c0_29 = arith.constant 0 : index
    %c0_30 = arith.constant 0 : index
    %69 = vector.load %arg2[%c4, %c0_29, %c0_30] : memref<6x32x32xbf16, #tpu.memory_space<vmem>>, vector<1x32x32xbf16>
    %70 = vector.shape_cast %69 : vector<1x32x32xbf16> to vector<32x32xbf16>
    %71 = arith.truncf %68 : vector<32x32xf32> to vector<32x32xbf16>
    %cst_31 = arith.constant dense<0.000000e+00> : vector<32x32xf32>
    %72 = tpu.matmul %71, %70, %cst_31 {dimension_numbers = #tpu.dot_dimension_numbers<[1], [0], [0], [1], [0, 0, 1, 1], [], []>} : vector<32x32xbf16>, vector<32x32xbf16>, vector<32x32xf32> -> vector<32x32xf32>
    %73 = arith.addf %60, %72 : vector<32x32xf32>
    %c12_i32 = arith.constant 12 : i32
    %74 = tpu.dynamic_rotate %0 by %c12_i32 dim 1 : vector<2x16x32xf32>, i32 -> vector<2x16x32xf32>
    %c12_i32_32 = arith.constant 12 : i32
    %75 = vector.broadcast %c12_i32_32 : i32 to vector<1x16x1xi32>
    %76 = arith.cmpi slt, %1, %75 : vector<1x16x1xi32>
    %cst_33 = arith.constant 0.000000e+00 : f32
    %77 = vector.shape_cast %76 : vector<1x16x1xi1> to vector<1x16x1xi1>
    %78 = vector.broadcast %77 : vector<1x16x1xi1> to vector<2x16x32xi1>
    %79 = vector.broadcast %cst_33 : f32 to vector<2x16x32xf32>
    %80 = arith.select %78, %74, %79 : vector<2x16x32xi1>, vector<2x16x32xf32>
    %81 = vector.shape_cast %80 : vector<2x16x32xf32> to vector<32x32xf32>
    %c5 = arith.constant 5 : index
    %c0_34 = arith.constant 0 : index
    %c0_35 = arith.constant 0 : index
    %82 = vector.load %arg2[%c5, %c0_34, %c0_35] : memref<6x32x32xbf16, #tpu.memory_space<vmem>>, vector<1x32x32xbf16>
    %83 = vector.shape_cast %82 : vector<1x32x32xbf16> to vector<32x32xbf16>
    %84 = arith.truncf %81 : vector<32x32xf32> to vector<32x32xbf16>
    %cst_36 = arith.constant dense<0.000000e+00> : vector<32x32xf32>
    %85 = tpu.matmul %84, %83, %cst_36 {dimension_numbers = #tpu.dot_dimension_numbers<[1], [0], [0], [1], [0, 0, 1, 1], [], []>} : vector<32x32xbf16>, vector<32x32xbf16>, vector<32x32xf32> -> vector<32x32xf32>
    %86 = arith.addf %73, %85 : vector<32x32xf32>
    %cst_37 = arith.constant 0.000000e+00 : f32
    %87 = vector.broadcast %cst_37 : f32 to vector<32x32xf32>
    %88 = arith.maximumf %86, %87 : vector<32x32xf32>
    %cst_38 = arith.constant dense<0.000000e+00> : vector<32xf32>
    %89 = vector.multi_reduction <add>, %88, %cst_38 [0] : vector<32x32xf32> to vector<32xf32>
    %90 = vector.shape_cast %89 : vector<32xf32> to vector<1x32xf32>
    %91 = arith.mulf %88, %88 : vector<32x32xf32>
    %cst_39 = arith.constant dense<0.000000e+00> : vector<32xf32>
    %92 = vector.multi_reduction <add>, %91, %cst_39 [0] : vector<32x32xf32> to vector<32xf32>
    %93 = vector.shape_cast %92 : vector<32xf32> to vector<1x32xf32>
    %cst_40 = arith.constant 3.200000e+01 : f32
    %94 = vector.broadcast %cst_40 : f32 to vector<1x32xf32>
    %95 = arith.divf %90, %94 : vector<1x32xf32>
    %cst_41 = arith.constant 3.200000e+01 : f32
    %96 = vector.broadcast %cst_41 : f32 to vector<1x32xf32>
    %97 = arith.divf %93, %96 : vector<1x32xf32>
    %98 = arith.mulf %95, %95 : vector<1x32xf32>
    %99 = arith.subf %97, %98 : vector<1x32xf32>
    %cst_42 = arith.constant 0.000000e+00 : f32
    %100 = vector.broadcast %cst_42 : f32 to vector<1x32xf32>
    %101 = arith.maximumf %99, %100 : vector<1x32xf32>
    %cst_43 = arith.constant 9.99999974E-6 : f32
    %102 = vector.broadcast %cst_43 : f32 to vector<1x32xf32>
    %103 = arith.addf %101, %102 : vector<1x32xf32>
    %104 = math.rsqrt %103 : vector<1x32xf32>
    %105 = tpu.iota {dimensions = array<i32: 1>} : vector<1x32xi32>
    %c24_i32 = arith.constant 24 : i32
    %106 = vector.broadcast %c24_i32 : i32 to vector<1x32xi32>
    %107 = arith.cmpi slt, %105, %106 : vector<1x32xi32>
    %c0_44 = arith.constant 0 : index
    %c0_45 = arith.constant 0 : index
    %108 = vector.load %arg5[%c0_44, %c0_45] : memref<1x32xf32, #tpu.memory_space<vmem>>, vector<1x32xf32>
    %109 = arith.mulf %108, %104 : vector<1x32xf32>
    %cst_46 = arith.constant 1.000000e+00 : f32
    %110 = vector.broadcast %cst_46 : f32 to vector<1x32xf32>
    %111 = arith.select %107, %109, %110 : vector<1x32xi1>, vector<1x32xf32>
    %c0_47 = arith.constant 0 : index
    %c0_48 = arith.constant 0 : index
    %112 = vector.load %arg6[%c0_47, %c0_48] : memref<1x32xf32, #tpu.memory_space<vmem>>, vector<1x32xf32>
    %113 = arith.mulf %95, %108 : vector<1x32xf32>
    %114 = arith.mulf %113, %104 : vector<1x32xf32>
    %115 = arith.subf %112, %114 : vector<1x32xf32>
    %cst_49 = arith.constant 0.000000e+00 : f32
    %116 = vector.broadcast %cst_49 : f32 to vector<1x32xf32>
    %117 = arith.select %107, %115, %116 : vector<1x32xi1>, vector<1x32xf32>
    %118 = vector.broadcast %111 : vector<1x32xf32> to vector<32x32xf32>
    %119 = arith.mulf %88, %118 : vector<32x32xf32>
    %120 = vector.broadcast %117 : vector<1x32xf32> to vector<32x32xf32>
    %121 = arith.addf %119, %120 : vector<32x32xf32>
    %c0_50 = arith.constant 0 : index
    %c0_51 = arith.constant 0 : index
    %122 = vector.load %arg7[%c0_50, %c0_51] : memref<32x12xbf16, #tpu.memory_space<vmem>>, vector<32x12xbf16>
    %123 = arith.truncf %121 : vector<32x32xf32> to vector<32x32xbf16>
    %cst_52 = arith.constant dense<0.000000e+00> : vector<32x12xf32>
    %124 = tpu.matmul %123, %122, %cst_52 {dimension_numbers = #tpu.dot_dimension_numbers<[1], [0], [0], [1], [0, 0, 1, 1], [], []>} : vector<32x32xbf16>, vector<32x12xbf16>, vector<32x12xf32> -> vector<32x12xf32>
    %c0_53 = arith.constant 0 : index
    %c0_54 = arith.constant 0 : index
    %125 = vector.load %arg8[%c0_53, %c0_54] : memref<1x12xf32, #tpu.memory_space<vmem>>, vector<1x12xf32>
    %126 = vector.broadcast %125 : vector<1x12xf32> to vector<32x12xf32>
    %127 = arith.addf %124, %126 : vector<32x12xf32>
    %128 = vector.shape_cast %127 : vector<32x12xf32> to vector<2x16x12xf32>
    %129 = vector.extract_strided_slice %128 {offsets = [0, 0, 0], sizes = [2, 16, 4], strides = [1, 1, 1]} : vector<2x16x12xf32> to vector<2x16x4xf32>
    %130 = vector.extract_strided_slice %128 {offsets = [0, 0, 4], sizes = [2, 16, 4], strides = [1, 1, 1]} : vector<2x16x12xf32> to vector<2x16x4xf32>
    %131 = vector.extract_strided_slice %128 {offsets = [0, 0, 8], sizes = [2, 16, 4], strides = [1, 1, 1]} : vector<2x16x12xf32> to vector<2x16x4xf32>
    %cst_55 = arith.constant 6.250000e-02 : f32
    %132 = vector.broadcast %cst_55 : f32 to vector<2x16x4xf32>
    %133 = arith.mulf %129, %132 : vector<2x16x4xf32>
    %134 = arith.truncf %133 : vector<2x16x4xf32> to vector<2x16x4xbf16>
    %135 = arith.truncf %130 : vector<2x16x4xf32> to vector<2x16x4xbf16>
    %136 = arith.truncf %131 : vector<2x16x4xf32> to vector<2x16x4xbf16>
    "tpu.trace_start"() <{level = 10 : i32, message = "btc,bsc->bts"}> : () -> ()
    %cst_56 = arith.constant dense<0.000000e+00> : vector<2x16x16xf32>
    %137 = tpu.matmul %134, %135, %cst_56 {dimension_numbers = #tpu.dot_dimension_numbers<[2], [2], [1], [1], [0, 0, 0, 1, 1, 1], [0], [0]>} : vector<2x16x4xbf16>, vector<2x16x4xbf16>, vector<2x16x16xf32> -> vector<2x16x16xf32>
    "tpu.trace_stop"() : () -> ()
    %138 = arith.truncf %137 : vector<2x16x16xf32> to vector<2x16x16xbf16>
    "tpu.trace_start"() <{level = 10 : i32, message = "bts,bsc->btc"}> : () -> ()
    %cst_57 = arith.constant dense<0.000000e+00> : vector<2x16x4xf32>
    %139 = tpu.matmul %138, %136, %cst_57 {dimension_numbers = #tpu.dot_dimension_numbers<[2], [1], [1], [2], [0, 0, 0, 1, 1, 2], [0], [0]>} : vector<2x16x16xbf16>, vector<2x16x4xbf16>, vector<2x16x4xf32> -> vector<2x16x4xf32>
    "tpu.trace_stop"() : () -> ()
    %140 = vector.shape_cast %139 : vector<2x16x4xf32> to vector<32x4xf32>
    %c0_58 = arith.constant 0 : index
    %c0_59 = arith.constant 0 : index
    %141 = vector.load %arg9[%c0_58, %c0_59] : memref<4x32xbf16, #tpu.memory_space<vmem>>, vector<4x32xbf16>
    %142 = arith.truncf %140 : vector<32x4xf32> to vector<32x4xbf16>
    %cst_60 = arith.constant dense<0.000000e+00> : vector<32x32xf32>
    %143 = tpu.matmul %142, %141, %cst_60 {dimension_numbers = #tpu.dot_dimension_numbers<[1], [0], [0], [1], [0, 0, 1, 1], [], []>} : vector<32x4xbf16>, vector<4x32xbf16>, vector<32x32xf32> -> vector<32x32xf32>
    %c0_61 = arith.constant 0 : index
    %c0_62 = arith.constant 0 : index
    %144 = vector.load %arg10[%c0_61, %c0_62] : memref<1x32xf32, #tpu.memory_space<vmem>>, vector<1x32xf32>
    %145 = vector.broadcast %144 : vector<1x32xf32> to vector<32x32xf32>
    %146 = arith.addf %143, %145 : vector<32x32xf32>
    %cst_63 = arith.constant dense<0.000000e+00> : vector<32xf32>
    %147 = vector.multi_reduction <add>, %146, %cst_63 [0] : vector<32x32xf32> to vector<32xf32>
    %148 = vector.shape_cast %147 : vector<32xf32> to vector<1x32xf32>
    %149 = arith.mulf %146, %146 : vector<32x32xf32>
    %cst_64 = arith.constant dense<0.000000e+00> : vector<32xf32>
    %150 = vector.multi_reduction <add>, %149, %cst_64 [0] : vector<32x32xf32> to vector<32xf32>
    %151 = vector.shape_cast %150 : vector<32xf32> to vector<1x32xf32>
    %cst_65 = arith.constant 3.200000e+01 : f32
    %152 = vector.broadcast %cst_65 : f32 to vector<1x32xf32>
    %153 = arith.divf %148, %152 : vector<1x32xf32>
    %cst_66 = arith.constant 3.200000e+01 : f32
    %154 = vector.broadcast %cst_66 : f32 to vector<1x32xf32>
    %155 = arith.divf %151, %154 : vector<1x32xf32>
    %156 = arith.mulf %153, %153 : vector<1x32xf32>
    %157 = arith.subf %155, %156 : vector<1x32xf32>
    %cst_67 = arith.constant 0.000000e+00 : f32
    %158 = vector.broadcast %cst_67 : f32 to vector<1x32xf32>
    %159 = arith.maximumf %157, %158 : vector<1x32xf32>
    %cst_68 = arith.constant 9.99999974E-6 : f32
    %160 = vector.broadcast %cst_68 : f32 to vector<1x32xf32>
    %161 = arith.addf %159, %160 : vector<1x32xf32>
    %162 = math.rsqrt %161 : vector<1x32xf32>
    %163 = vector.broadcast %153 : vector<1x32xf32> to vector<32x32xf32>
    %164 = arith.subf %146, %163 : vector<32x32xf32>
    %c0_69 = arith.constant 0 : index
    %c0_70 = arith.constant 0 : index
    %165 = vector.load %arg11[%c0_69, %c0_70] : memref<1x32xf32, #tpu.memory_space<vmem>>, vector<1x32xf32>
    %166 = arith.mulf %162, %165 : vector<1x32xf32>
    %167 = vector.broadcast %166 : vector<1x32xf32> to vector<32x32xf32>
    %168 = arith.mulf %164, %167 : vector<32x32xf32>
    %c0_71 = arith.constant 0 : index
    %c0_72 = arith.constant 0 : index
    %169 = vector.load %arg12[%c0_71, %c0_72] : memref<1x32xf32, #tpu.memory_space<vmem>>, vector<1x32xf32>
    %170 = vector.broadcast %169 : vector<1x32xf32> to vector<32x32xf32>
    %171 = arith.addf %168, %170 : vector<32x32xf32>
    %c24_i32_73 = arith.constant 24 : i32
    %172 = vector.broadcast %c24_i32_73 : i32 to vector<1x32xi32>
    %173 = arith.cmpi sge, %105, %172 : vector<1x32xi32>
    %cst_74 = arith.constant 0.000000e+00 : f32
    %174 = vector.shape_cast %173 : vector<1x32xi1> to vector<1x32xi1>
    %175 = vector.broadcast %174 : vector<1x32xi1> to vector<32x32xi1>
    %176 = vector.broadcast %cst_74 : f32 to vector<32x32xf32>
    %177 = arith.select %175, %171, %176 : vector<32x32xi1>, vector<32x32xf32>
    %178 = arith.addf %121, %177 : vector<32x32xf32>
    %179 = vector.shape_cast %178 : vector<32x32xf32> to vector<2x16x32xf32>
    %c1_i32_75 = arith.constant 1 : i32
    %180 = tpu.dynamic_rotate %179 by %c1_i32_75 dim 1 : vector<2x16x32xf32>, i32 -> vector<2x16x32xf32>
    %c1_i32_76 = arith.constant 1 : i32
    %181 = vector.broadcast %c1_i32_76 : i32 to vector<1x16x1xi32>
    %182 = arith.cmpi sge, %1, %181 : vector<1x16x1xi32>
    %cst_77 = arith.constant 0.000000e+00 : f32
    %183 = vector.shape_cast %182 : vector<1x16x1xi1> to vector<1x16x1xi1>
    %184 = vector.broadcast %183 : vector<1x16x1xi1> to vector<2x16x32xi1>
    %185 = vector.broadcast %cst_77 : f32 to vector<2x16x32xf32>
    %186 = arith.select %184, %180, %185 : vector<2x16x32xi1>, vector<2x16x32xf32>
    %187 = vector.shape_cast %186 : vector<2x16x32xf32> to vector<32x32xf32>
    %c0_78 = arith.constant 0 : index
    %c0_79 = arith.constant 0 : index
    %c0_80 = arith.constant 0 : index
    %188 = vector.load %arg13[%c0_78, %c0_79, %c0_80] : memref<3x32x32xbf16, #tpu.memory_space<vmem>>, vector<1x32x32xbf16>
    %189 = vector.shape_cast %188 : vector<1x32x32xbf16> to vector<32x32xbf16>
    %190 = arith.truncf %187 : vector<32x32xf32> to vector<32x32xbf16>
    %cst_81 = arith.constant dense<0.000000e+00> : vector<32x32xf32>
    %191 = tpu.matmul %190, %189, %cst_81 {dimension_numbers = #tpu.dot_dimension_numbers<[1], [0], [0], [1], [0, 0, 1, 1], [], []>} : vector<32x32xbf16>, vector<32x32xbf16>, vector<32x32xf32> -> vector<32x32xf32>
    %192 = vector.shape_cast %179 : vector<2x16x32xf32> to vector<32x32xf32>
    %c1_82 = arith.constant 1 : index
    %c0_83 = arith.constant 0 : index
    %c0_84 = arith.constant 0 : index
    %193 = vector.load %arg13[%c1_82, %c0_83, %c0_84] : memref<3x32x32xbf16, #tpu.memory_space<vmem>>, vector<1x32x32xbf16>
    %194 = vector.shape_cast %193 : vector<1x32x32xbf16> to vector<32x32xbf16>
    %195 = arith.truncf %192 : vector<32x32xf32> to vector<32x32xbf16>
    %cst_85 = arith.constant dense<0.000000e+00> : vector<32x32xf32>
    %196 = tpu.matmul %195, %194, %cst_85 {dimension_numbers = #tpu.dot_dimension_numbers<[1], [0], [0], [1], [0, 0, 1, 1], [], []>} : vector<32x32xbf16>, vector<32x32xbf16>, vector<32x32xf32> -> vector<32x32xf32>
    %197 = arith.addf %191, %196 : vector<32x32xf32>
    %c15_i32_86 = arith.constant 15 : i32
    %198 = tpu.dynamic_rotate %179 by %c15_i32_86 dim 1 : vector<2x16x32xf32>, i32 -> vector<2x16x32xf32>
    %c15_i32_87 = arith.constant 15 : i32
    %199 = vector.broadcast %c15_i32_87 : i32 to vector<1x16x1xi32>
    %200 = arith.cmpi slt, %1, %199 : vector<1x16x1xi32>
    %cst_88 = arith.constant 0.000000e+00 : f32
    %201 = vector.shape_cast %200 : vector<1x16x1xi1> to vector<1x16x1xi1>
    %202 = vector.broadcast %201 : vector<1x16x1xi1> to vector<2x16x32xi1>
    %203 = vector.broadcast %cst_88 : f32 to vector<2x16x32xf32>
    %204 = arith.select %202, %198, %203 : vector<2x16x32xi1>, vector<2x16x32xf32>
    %205 = vector.shape_cast %204 : vector<2x16x32xf32> to vector<32x32xf32>
    %c2_89 = arith.constant 2 : index
    %c0_90 = arith.constant 0 : index
    %c0_91 = arith.constant 0 : index
    %206 = vector.load %arg13[%c2_89, %c0_90, %c0_91] : memref<3x32x32xbf16, #tpu.memory_space<vmem>>, vector<1x32x32xbf16>
    %207 = vector.shape_cast %206 : vector<1x32x32xbf16> to vector<32x32xbf16>
    %208 = arith.truncf %205 : vector<32x32xf32> to vector<32x32xbf16>
    %cst_92 = arith.constant dense<0.000000e+00> : vector<32x32xf32>
    %209 = tpu.matmul %208, %207, %cst_92 {dimension_numbers = #tpu.dot_dimension_numbers<[1], [0], [0], [1], [0, 0, 1, 1], [], []>} : vector<32x32xbf16>, vector<32x32xbf16>, vector<32x32xf32> -> vector<32x32xf32>
    %210 = arith.addf %197, %209 : vector<32x32xf32>
    %c0_93 = arith.constant 0 : index
    %c0_94 = arith.constant 0 : index
    %211 = vector.load %arg14[%c0_93, %c0_94] : memref<1x32xf32, #tpu.memory_space<vmem>>, vector<1x32xf32>
    %212 = vector.broadcast %211 : vector<1x32xf32> to vector<32x32xf32>
    %213 = arith.addf %210, %212 : vector<32x32xf32>
    %cst_95 = arith.constant 0.000000e+00 : f32
    %214 = vector.broadcast %cst_95 : f32 to vector<32x32xf32>
    %215 = arith.maximumf %213, %214 : vector<32x32xf32>
    %cst_96 = arith.constant dense<0.000000e+00> : vector<32xf32>
    %216 = vector.multi_reduction <add>, %215, %cst_96 [0] : vector<32x32xf32> to vector<32xf32>
    %217 = vector.shape_cast %216 : vector<32xf32> to vector<1x32xf32>
    %218 = arith.mulf %215, %215 : vector<32x32xf32>
    %cst_97 = arith.constant dense<0.000000e+00> : vector<32xf32>
    %219 = vector.multi_reduction <add>, %218, %cst_97 [0] : vector<32x32xf32> to vector<32xf32>
    %220 = vector.shape_cast %219 : vector<32xf32> to vector<1x32xf32>
    %cst_98 = arith.constant 3.200000e+01 : f32
    %221 = vector.broadcast %cst_98 : f32 to vector<1x32xf32>
    %222 = arith.divf %217, %221 : vector<1x32xf32>
    %cst_99 = arith.constant 3.200000e+01 : f32
    %223 = vector.broadcast %cst_99 : f32 to vector<1x32xf32>
    %224 = arith.divf %220, %223 : vector<1x32xf32>
    %225 = arith.mulf %222, %222 : vector<1x32xf32>
    %226 = arith.subf %224, %225 : vector<1x32xf32>
    %cst_100 = arith.constant 0.000000e+00 : f32
    %227 = vector.broadcast %cst_100 : f32 to vector<1x32xf32>
    %228 = arith.maximumf %226, %227 : vector<1x32xf32>
    %cst_101 = arith.constant 9.99999974E-6 : f32
    %229 = vector.broadcast %cst_101 : f32 to vector<1x32xf32>
    %230 = arith.addf %228, %229 : vector<1x32xf32>
    %231 = math.rsqrt %230 : vector<1x32xf32>
    %232 = vector.broadcast %222 : vector<1x32xf32> to vector<32x32xf32>
    %233 = arith.subf %215, %232 : vector<32x32xf32>
    %c0_102 = arith.constant 0 : index
    %c0_103 = arith.constant 0 : index
    %234 = vector.load %arg15[%c0_102, %c0_103] : memref<1x32xf32, #tpu.memory_space<vmem>>, vector<1x32xf32>
    %235 = arith.mulf %231, %234 : vector<1x32xf32>
    %236 = vector.broadcast %235 : vector<1x32xf32> to vector<32x32xf32>
    %237 = arith.mulf %233, %236 : vector<32x32xf32>
    %c0_104 = arith.constant 0 : index
    %c0_105 = arith.constant 0 : index
    %238 = vector.load %arg16[%c0_104, %c0_105] : memref<1x32xf32, #tpu.memory_space<vmem>>, vector<1x32xf32>
    %239 = vector.broadcast %238 : vector<1x32xf32> to vector<32x32xf32>
    %240 = arith.addf %237, %239 : vector<32x32xf32>
    %241 = vector.shape_cast %240 : vector<32x32xf32> to vector<2x16x32xf32>
    %242 = arith.addf %241, %0 : vector<2x16x32xf32>
    %c0_106 = arith.constant 0 : index
    %c0_107 = arith.constant 0 : index
    %c0_108 = arith.constant 0 : index
    %243 = vector.load %arg17[%c0_106, %c0_107, %c0_108] : memref<2x16x32xf32, #tpu.memory_space<vmem>>, vector<2x16x32xf32>
    tpu.vector_store %arg17[%c0_106, %c0_107, %c0_108], %242 {strides = array<i32>} : memref<2x16x32xf32, #tpu.memory_space<vmem>>, vector<2x16x32xf32>,
    return
  }
  func.func @transform_0(%arg0: i32) -> (i32, i32, i32) {
    %c0_i32 = arith.constant 0 : i32
    %c0_i32_0 = arith.constant 0 : i32
    %c0_i32_1 = arith.constant 0 : i32
    %c0_i32_2 = arith.constant 0 : i32
    return %c0_i32, %c0_i32_0, %c0_i32_1 : i32, i32, i32
  }
  func.func @transform_1(%arg0: i32) -> (i32, i32, i32) {
    %c0_i32 = arith.constant 0 : i32
    %c0_i32_0 = arith.constant 0 : i32
    %c0_i32_1 = arith.constant 0 : i32
    %c0_i32_2 = arith.constant 0 : i32
    return %c0_i32, %c0_i32_0, %c0_i32_1 : i32, i32, i32
  }
  func.func @transform_2(%arg0: i32) -> (i32, i32) {
    %c0_i32 = arith.constant 0 : i32
    %c0_i32_0 = arith.constant 0 : i32
    %c0_i32_1 = arith.constant 0 : i32
    return %c0_i32, %c0_i32_0 : i32, i32
  }
  func.func @transform_3(%arg0: i32) -> (i32, i32) {
    %c0_i32 = arith.constant 0 : i32
    %c0_i32_0 = arith.constant 0 : i32
    %c0_i32_1 = arith.constant 0 : i32
    return %c0_i32, %c0_i32_0 : i32, i32
  }
  func.func @transform_4(%arg0: i32) -> (i32, i32) {
    %c0_i32 = arith.constant 0 : i32
    %c0_i32_0 = arith.constant 0 : i32
    %c0_i32_1 = arith.constant 0 : i32
    return %c0_i32, %c0_i32_0 : i32, i32
  }
  func.func @transform_5(%arg0: i32) -> (i32, i32) {
    %c0_i32 = arith.constant 0 : i32
    %c0_i32_0 = arith.constant 0 : i32
    %c0_i32_1 = arith.constant 0 : i32
    return %c0_i32, %c0_i32_0 : i32, i32
  }
  func.func @transform_6(%arg0: i32) -> (i32, i32) {
    %c0_i32 = arith.constant 0 : i32
    %c0_i32_0 = arith.constant 0 : i32
    %c0_i32_1 = arith.constant 0 : i32
    return %c0_i32, %c0_i32_0 : i32, i32
  }
  func.func @transform_7(%arg0: i32) -> (i32, i32) {
    %c0_i32 = arith.constant 0 : i32
    %c0_i32_0 = arith.constant 0 : i32
    %c0_i32_1 = arith.constant 0 : i32
    return %c0_i32, %c0_i32_0 : i32, i32
  }
  func.func @transform_8(%arg0: i32) -> (i32, i32) {
    %c0_i32 = arith.constant 0 : i32
    %c0_i32_0 = arith.constant 0 : i32
    %c0_i32_1 = arith.constant 0 : i32
    return %c0_i32, %c0_i32_0 : i32, i32
  }
  func.func @transform_9(%arg0: i32) -> (i32, i32) {
    %c0_i32 = arith.constant 0 : i32
    %c0_i32_0 = arith.constant 0 : i32
    %c0_i32_1 = arith.constant 0 : i32
    return %c0_i32, %c0_i32_0 : i32, i32
  }
  func.func @transform_10(%arg0: i32) -> (i32, i32) {
    %c0_i32 = arith.constant 0 : i32
    %c0_i32_0 = arith.constant 0 : i32
    %c0_i32_1 = arith.constant 0 : i32
    return %c0_i32, %c0_i32_0 : i32, i32
  }
  func.func @transform_11(%arg0: i32) -> (i32, i32) {
    %c0_i32 = arith.constant 0 : i32
    %c0_i32_0 = arith.constant 0 : i32
    %c0_i32_1 = arith.constant 0 : i32
    return %c0_i32, %c0_i32_0 : i32, i32
  }
  func.func @transform_12(%arg0: i32) -> (i32, i32, i32) {
    %c0_i32 = arith.constant 0 : i32
    %c0_i32_0 = arith.constant 0 : i32
    %c0_i32_1 = arith.constant 0 : i32
    %c0_i32_2 = arith.constant 0 : i32
    return %c0_i32, %c0_i32_0, %c0_i32_1 : i32, i32, i32
  }
  func.func @transform_13(%arg0: i32) -> (i32, i32) {
    %c0_i32 = arith.constant 0 : i32
    %c0_i32_0 = arith.constant 0 : i32
    %c0_i32_1 = arith.constant 0 : i32
    return %c0_i32, %c0_i32_0 : i32, i32
  }
  func.func @transform_14(%arg0: i32) -> (i32, i32) {
    %c0_i32 = arith.constant 0 : i32
    %c0_i32_0 = arith.constant 0 : i32
    %c0_i32_1 = arith.constant 0 : i32
    return %c0_i32, %c0_i32_0 : i32, i32
  }
  func.func @transform_15(%arg0: i32) -> (i32, i32) {
    %c0_i32 = arith.constant 0 : i32
    %c0_i32_0 = arith.constant 0 : i32
    %c0_i32_1 = arith.constant 0 : i32
    return %c0_i32, %c0_i32_0 : i32, i32
  }
  func.func @transform_16(%arg0: i32) -> (i32, i32, i32) {
    %c0_i32 = arith.constant 0 : i32
    %c0_i32_0 = arith.constant 0 : i32
    %c0_i32_1 = arith.constant 0 : i32
    %c0_i32_2 = arith.constant 0 : i32
    return %c0_i32, %c0_i32_0, %c0_i32_1 : i32, i32, i32
  }
}

</mosaic_0001>

<llo_original>
// kernel: aggregate_forward.1
$region0: #{aggregate_forward.1}
  #allocation0 [shape = 'u32[]', space=smem, size = 0x4, offset = 0x4, fixed_abs, tag = 'smem constant byte address 0x4 - core index']
  #allocation1 [shape = 'u32[144,128]{1,0:T(1,128)}', space=vmem, size = 0x12000, scoped, tag = 'internal scratch']
  %s0 = inlined_call_operand.hbm [shape: f32[2,16,32], index: 0, kind: input, shape index: {}]
  %s1 = inlined_call_operand.hbm [shape: bf16[6,32,32], index: 1, kind: input, shape index: {}]
  %s2 = inlined_call_operand.hbm [shape: bf16[32,32], index: 2, kind: input, shape index: {}]
  %s3 = inlined_call_operand.hbm [shape: f32[1,32], index: 3, kind: input, shape index: {}]
  %s4 = inlined_call_operand.hbm [shape: f32[1,32], index: 4, kind: input, shape index: {}]
  %s5 = inlined_call_operand.hbm [shape: f32[1,32], index: 5, kind: input, shape index: {}]
  %s6 = inlined_call_operand.hbm [shape: bf16[32,12], index: 6, kind: input, shape index: {}]
  %s7 = inlined_call_operand.hbm [shape: f32[1,12], index: 7, kind: input, shape index: {}]
  %s8 = inlined_call_operand.hbm [shape: bf16[4,32], index: 8, kind: input, shape index: {}]
  %s9 = inlined_call_operand.hbm [shape: f32[1,32], index: 9, kind: input, shape index: {}]
  %s10 = inlined_call_operand.hbm [shape: f32[1,32], index: 10, kind: input, shape index: {}]
  %s11 = inlined_call_operand.hbm [shape: f32[1,32], index: 11, kind: input, shape index: {}]
  %s12 = inlined_call_operand.hbm [shape: bf16[3,32,32], index: 12, kind: input, shape index: {}]
  %s13 = inlined_call_operand.hbm [shape: f32[1,32], index: 13, kind: input, shape index: {}]
  %s14 = inlined_call_operand.hbm [shape: f32[1,32], index: 14, kind: input, shape index: {}]
  %s15 = inlined_call_operand.hbm [shape: f32[1,32], index: 15, kind: input, shape index: {}]
  %s16 = inlined_call_operand.hbm [shape: f32[2,16,32], index: 16, kind: output, shape index: {}]
  %s17 = sld [smem:[#allocation0]]
  $region138: #{aggregate_forward.1} parent=0
    _
  %s19 = ssub.s32 1, %s17
  %s20 = scalar_select 0, %s19, %s17
  $region1: #{aggregate_forward.1} parent=0
    #allocation2 [shape = 'u8[16384]{0}', space=vmem, size = 0x4000, scoped, tag = 'input window, operand 0, single buffered']
    #allocation3 [shape = 's32[1]{0}', space=sflag, size = 0x4, scoped, tag = 'scoped memory for aggregate_forward.1']
    #allocation4 [shape = 's32[1]{0}', space=sflag, size = 0x4, scoped, tag = 'scoped memory for aggregate_forward.1']
    #allocation5 [shape = 'u8[49152]{0}', space=vmem, size = 0xc000, scoped, tag = 'input window, operand 1, single buffered']
    #allocation6 [shape = 's32[1]{0}', space=sflag, size = 0x4, scoped, tag = 'scoped memory for aggregate_forward.1']
    #allocation7 [shape = 'u8[8192]{0}', space=vmem, size = 0x2000, scoped, tag = 'input window, operand 2, single buffered']
    #allocation8 [shape = 'u8[512]{0}', space=vmem, size = 0x400, scoped, tag = 'input window, operand 3, single buffered']
    #allocation9 [shape = 's32[1]{0}', space=sflag, size = 0x4, scoped, tag = 'scoped memory for aggregate_forward.1']
    #allocation10 [shape = 'u8[512]{0}', space=vmem, size = 0x400, scoped, tag = 'input window, operand 4, single buffered']
    #allocation11 [shape = 'u8[512]{0}', space=vmem, size = 0x400, scoped, tag = 'input window, operand 5, single buffered']
    #allocation12 [shape = 's32[1]{0}', space=sflag, size = 0x4, scoped, tag = 'scoped memory for aggregate_forward.1']
    #allocation13 [shape = 'u8[8192]{0}', space=vmem, size = 0x2000, scoped, tag = 'input window, operand 6, single buffered']
    #allocation14 [shape = 'u8[512]{0}', space=vmem, size = 0x400, scoped, tag = 'input window, operand 7, single buffered']
    #allocation15 [shape = 's32[1]{0}', space=sflag, size = 0x4, scoped, tag = 'scoped memory for aggregate_forward.1']
    #allocation16 [shape = 'u8[1024]{0}', space=vmem, size = 0x400, scoped, tag = 'input window, operand 8, single buffered']
    #allocation17 [shape = 'u8[512]{0}', space=vmem, size = 0x400, scoped, tag = 'input window, operand 9, single buffered']
    #allocation18 [shape = 's32[1]{0}', space=sflag, size = 0x4, scoped, tag = 'scoped memory for aggregate_forward.1']
    #allocation19 [shape = 'u8[512]{0}', space=vmem, size = 0x400, scoped, tag = 'input window, operand 10, single buffered']
    #allocation20 [shape = 'u8[512]{0}', space=vmem, size = 0x400, scoped, tag = 'input window, operand 11, single buffered']
    #allocation21 [shape = 's32[1]{0}', space=sflag, size = 0x4, scoped, tag = 'scoped memory for aggregate_forward.1']
    #allocation22 [shape = 'u8[24576]{0}', space=vmem, size = 0x6000, scoped, tag = 'input window, operand 12, single buffered']
    #allocation23 [shape = 'u8[512]{0}', space=vmem, size = 0x400, scoped, tag = 'input window, operand 13, single buffered']
    #allocation24 [shape = 's32[1]{0}', space=sflag, size = 0x4, scoped, tag = 'scoped memory for aggregate_forward.1']
    #allocation25 [shape = 'u8[512]{0}', space=vmem, size = 0x400, scoped, tag = 'input window, operand 14, single buffered']
    #allocation26 [shape = 'u8[512]{0}', space=vmem, size = 0x400, scoped, tag = 'input window, operand 15, single buffered']
    #allocation27 [shape = 's32[1]{0}', space=sflag, size = 0x4, scoped, tag = 'scoped memory for aggregate_forward.1']
    #allocation28 [shape = 'u8[16384]{0}', space=vmem, size = 0x4000, scoped, tag = 'output window, operand 0, single buffered']
    %21 = vsyncpa [#allocation3], 0
    %22 = vsyncpa [#allocation6], 0
    %23 = vsyncpa [#allocation9], 0
    %24 = vsyncpa [#allocation12], 0
    %25 = vsyncpa [#allocation15], 0
    %26 = vsyncpa [#allocation18], 0
    %27 = vsyncpa [#allocation21], 0
    %28 = vsyncpa [#allocation24], 0
    %29 = vsyncpa [#allocation27], 0
    %30 = vsyncpa [#allocation4], 0
    // Predicated region
    $region2: #{aggregate_forward.1} parent=1 // pred_check
      _
    $region3: #{aggregate_forward.1} parent=1 // pred_check_branch
      %32 = sbr.rel (0) target = $region5
    $region4: #{aggregate_forward.1} parent=1 // pred_region
      %s34 = ssub.s32 512, 512
      %35 = vsyncadd [#allocation3], %s34
      %s36 = sshll.u32 [#allocation2], 4
      %s37 = int_to_ptr.vmem [resolvable:$true] %s36
      %42 = dma.hbm_to_vmem [thread:$0]  %s0, 512, %s37, [#allocation3], 128, 128, 8
    $region5: #{aggregate_forward.1} parent=1 // pred_fallthru
      _
    // Predicated region
    $region6: #{aggregate_forward.1} parent=1 // pred_check
      _
    $region7: #{aggregate_forward.1} parent=1 // pred_check_branch
      %44 = sbr.rel (0) target = $region9
    $region8: #{aggregate_forward.1} parent=1 // pred_region
      %s46 = ssub.s32 1536, 1536
      %47 = vsyncadd [#allocation6], %s46
      %s48 = sshll.u32 [#allocation5], 4
      %s49 = int_to_ptr.vmem [resolvable:$true] %s48
      %54 = dma.hbm_to_vmem [thread:$0]  %s1, 1536, %s49, [#allocation6], 64, 64, 4
    $region9: #{aggregate_forward.1} parent=1 // pred_fallthru
      _
    // Predicated region
    $region10: #{aggregate_forward.1} parent=1 // pred_check
      _
    $region11: #{aggregate_forward.1} parent=1 // pred_check_branch
      %56 = sbr.rel (0) target = $region13
    $region12: #{aggregate_forward.1} parent=1 // pred_region
      %s58 = ssub.s32 256, 256
      %59 = vsyncadd [#allocation6], %s58
      %s60 = sshll.u32 [#allocation7], 4
      %s61 = int_to_ptr.vmem [resolvable:$true] %s60
      %66 = dma.hbm_to_vmem [thread:$0]  %s2, 256, %s61, [#allocation6], 64, 64, 4
    $region13: #{aggregate_forward.1} parent=1 // pred_fallthru
      _
    // Predicated region
    $region14: #{aggregate_forward.1} parent=1 // pred_check
      _
    $region15: #{aggregate_forward.1} parent=1 // pred_check_branch
      %68 = sbr.rel (0) target = $region17
    $region16: #{aggregate_forward.1} parent=1 // pred_region
      %s70 = ssub.s32 16, 16
      %71 = vsyncadd [#allocation9], %s70
      %s73 = sshll.u32 [#allocation8], 4
      %s74 = int_to_ptr.vmem [resolvable:$true] %s73
      %76 = dma.hbm_to_vmem [thread:$0]  %s3, 16, %s74, [#allocation9]
    $region17: #{aggregate_forward.1} parent=1 // pred_fallthru
      _
    // Predicated region
    $region18: #{aggregate_forward.1} parent=1 // pred_check
      _
    $region19: #{aggregate_forward.1} parent=1 // pred_check_branch
      %78 = sbr.rel (0) target = $region21
    $region20: #{aggregate_forward.1} parent=1 // pred_region
      %s80 = ssub.s32 16, 16
      %81 = vsyncadd [#allocation9], %s80
      %s83 = sshll.u32 [#allocation10], 4
      %s84 = int_to_ptr.vmem [resolvable:$true] %s83
      %86 = dma.hbm_to_vmem [thread:$0]  %s4, 16, %s84, [#allocation9]
    $region21: #{aggregate_forward.1} parent=1 // pred_fallthru
      _
    // Predicated region
    $region22: #{aggregate_forward.1} parent=1 // pred_check
      _
    $region23: #{aggregate_forward.1} parent=1 // pred_check_branch
      %88 = sbr.rel (0) target = $region25
    $region24: #{aggregate_forward.1} parent=1 // pred_region
      %s90 = ssub.s32 16, 16
      %91 = vsyncadd [#allocation12], %s90
      %s93 = sshll.u32 [#allocation11], 4
      %s94 = int_to_ptr.vmem [resolvable:$true] %s93
      %96 = dma.hbm_to_vmem [thread:$0]  %s5, 16, %s94, [#allocation12]
    $region25: #{aggregate_forward.1} parent=1 // pred_fallthru
      _
    // Predicated region
    $region26: #{aggregate_forward.1} parent=1 // pred_check
      _
    $region27: #{aggregate_forward.1} parent=1 // pred_check_branch
      %98 = sbr.rel (0) target = $region29
    $region28: #{aggregate_forward.1} parent=1 // pred_region
      %s100 = ssub.s32 256, 256
      %101 = vsyncadd [#allocation12], %s100
      %s102 = sshll.u32 [#allocation13], 4
      %s103 = int_to_ptr.vmem [resolvable:$true] %s102
      %108 = dma.hbm_to_vmem [thread:$0]  %s6, 256, %s103, [#allocation12], 64, 64, 4
    $region29: #{aggregate_forward.1} parent=1 // pred_fallthru
      _
    // Predicated region
    $region30: #{aggregate_forward.1} parent=1 // pred_check
      _
    $region31: #{aggregate_forward.1} parent=1 // pred_check_branch
      %110 = sbr.rel (0) target = $region33
    $region32: #{aggregate_forward.1} parent=1 // pred_region
      %s112 = ssub.s32 16, 16
      %113 = vsyncadd [#allocation15], %s112
      %s115 = sshll.u32 [#allocation14], 4
      %s116 = int_to_ptr.vmem [resolvable:$true] %s115
      %118 = dma.hbm_to_vmem [thread:$0]  %s7, 16, %s116, [#allocation15]
    $region33: #{aggregate_forward.1} parent=1 // pred_fallthru
      _
    // Predicated region
    $region34: #{aggregate_forward.1} parent=1 // pred_check
      _
    $region35: #{aggregate_forward.1} parent=1 // pred_check_branch
      %120 = sbr.rel (0) target = $region37
    $region36: #{aggregate_forward.1} parent=1 // pred_region
      %s122 = ssub.s32 32, 32
      %123 = vsyncadd [#allocation15], %s122
      %s125 = sshll.u32 [#allocation16], 4
      %s126 = int_to_ptr.vmem [resolvable:$true] %s125
      %128 = dma.hbm_to_vmem [thread:$0]  %s8, 32, %s126, [#allocation15]
    $region37: #{aggregate_forward.1} parent=1 // pred_fallthru
      _
    // Predicated region
    $region38: #{aggregate_forward.1} parent=1 // pred_check
      _
    $region39: #{aggregate_forward.1} parent=1 // pred_check_branch
      %130 = sbr.rel (0) target = $region41
    $region40: #{aggregate_forward.1} parent=1 // pred_region
      %s132 = ssub.s32 16, 16
      %133 = vsyncadd [#allocation18], %s132
      %s135 = sshll.u32 [#allocation17], 4
      %s136 = int_to_ptr.vmem [resolvable:$true] %s135
      %138 = dma.hbm_to_vmem [thread:$0]  %s9, 16, %s136, [#allocation18]
    $region41: #{aggregate_forward.1} parent=1 // pred_fallthru
      _
    // Predicated region
    $region42: #{aggregate_forward.1} parent=1 // pred_check
      _
    $region43: #{aggregate_forward.1} parent=1 // pred_check_branch
      %140 = sbr.rel (0) target = $region45
    $region44: #{aggregate_forward.1} parent=1 // pred_region
      %s142 = ssub.s32 16, 16
      %143 = vsyncadd [#allocation18], %s142
      %s145 = sshll.u32 [#allocation19], 4
      %s146 = int_to_ptr.vmem [resolvable:$true] %s145
      %148 = dma.hbm_to_vmem [thread:$0]  %s10, 16, %s146, [#allocation18]
    $region45: #{aggregate_forward.1} parent=1 // pred_fallthru
      _
    // Predicated region
    $region46: #{aggregate_forward.1} parent=1 // pred_check
      _
    $region47: #{aggregate_forward.1} parent=1 // pred_check_branch
      %150 = sbr.rel (0) target = $region49
    $region48: #{aggregate_forward.1} parent=1 // pred_region
      %s152 = ssub.s32 16, 16
      %153 = vsyncadd [#allocation21], %s152
      %s155 = sshll.u32 [#allocation20], 4
      %s156 = int_to_ptr.vmem [resolvable:$true] %s155
      %158 = dma.hbm_to_vmem [thread:$0]  %s11, 16, %s156, [#allocation21]
    $region49: #{aggregate_forward.1} parent=1 // pred_fallthru
      _
    // Predicated region
    $region50: #{aggregate_forward.1} parent=1 // pred_check
      _
    $region51: #{aggregate_forward.1} parent=1 // pred_check_branch
      %160 = sbr.rel (0) target = $region53
    $region52: #{aggregate_forward.1} parent=1 // pred_region
      %s162 = ssub.s32 768, 768
      %163 = vsyncadd [#allocation21], %s162
      %s164 = sshll.u32 [#allocation22], 4
      %s165 = int_to_ptr.vmem [resolvable:$true] %s164
      %170 = dma.hbm_to_vmem [thread:$0]  %s12, 768, %s165, [#allocation21], 64, 64, 4
    $region53: #{aggregate_forward.1} parent=1 // pred_fallthru
      _
    // Predicated region
    $region54: #{aggregate_forward.1} parent=1 // pred_check
      _
    $region55: #{aggregate_forward.1} parent=1 // pred_check_branch
      %172 = sbr.rel (0) target = $region57
    $region56: #{aggregate_forward.1} parent=1 // pred_region
      %s174 = ssub.s32 16, 16
      %175 = vsyncadd [#allocation24], %s174
      %s177 = sshll.u32 [#allocation23], 4
      %s178 = int_to_ptr.vmem [resolvable:$true] %s177
      %180 = dma.hbm_to_vmem [thread:$0]  %s13, 16, %s178, [#allocation24]
    $region57: #{aggregate_forward.1} parent=1 // pred_fallthru
      _
    // Predicated region
    $region58: #{aggregate_forward.1} parent=1 // pred_check
      _
    $region59: #{aggregate_forward.1} parent=1 // pred_check_branch
      %182 = sbr.rel (0) target = $region61
    $region60: #{aggregate_forward.1} parent=1 // pred_region
      %s184 = ssub.s32 16, 16
      %185 = vsyncadd [#allocation24], %s184
      %s187 = sshll.u32 [#allocation25], 4
      %s188 = int_to_ptr.vmem [resolvable:$true] %s187
      %190 = dma.hbm_to_vmem [thread:$0]  %s14, 16, %s188, [#allocation24]
    $region61: #{aggregate_forward.1} parent=1 // pred_fallthru
      _
    // Predicated region
    $region62: #{aggregate_forward.1} parent=1 // pred_check
      _
    $region63: #{aggregate_forward.1} parent=1 // pred_check_branch
      %192 = sbr.rel (0) target = $region65
    $region64: #{aggregate_forward.1} parent=1 // pred_region
      %s194 = ssub.s32 16, 16
      %195 = vsyncadd [#allocation27], %s194
      %s197 = sshll.u32 [#allocation26], 4
      %s198 = int_to_ptr.vmem [resolvable:$true] %s197
      %200 = dma.hbm_to_vmem [thread:$0]  %s15, 16, %s198, [#allocation27]
    $region65: #{aggregate_forward.1} parent=1 // pred_fallthru
      _
    // Predicated region
    $region66: #{aggregate_forward.1} parent=1 // pred_check
      _
    $region67: #{aggregate_forward.1} parent=1 // pred_check_branch
      %202 = sbr.rel (0) target = $region69
    $region68: #{aggregate_forward.1} parent=1 // pred_region
      %203 = dma.done [#allocation3], 512
    $region69: #{aggregate_forward.1} parent=1 // pred_fallthru
      _
    // Predicated region
    $region70: #{aggregate_forward.1} parent=1 // pred_check
      _
    $region71: #{aggregate_forward.1} parent=1 // pred_check_branch
      %205 = sbr.rel (0) target = $region73
    $region72: #{aggregate_forward.1} parent=1 // pred_region
      %206 = dma.done [#allocation6], 1536
    $region73: #{aggregate_forward.1} parent=1 // pred_fallthru
      _
    // Predicated region
    $region74: #{aggregate_forward.1} parent=1 // pred_check
      _
    $region75: #{aggregate_forward.1} parent=1 // pred_check_branch
      %208 = sbr.rel (0) target = $region77
    $region76: #{aggregate_forward.1} parent=1 // pred_region
      %209 = dma.done [#allocation6], 256
    $region77: #{aggregate_forward.1} parent=1 // pred_fallthru
      _
    // Predicated region
    $region78: #{aggregate_forward.1} parent=1 // pred_check
      _
    $region79: #{aggregate_forward.1} parent=1 // pred_check_branch
      %211 = sbr.rel (0) target = $region81
    $region80: #{aggregate_forward.1} parent=1 // pred_region
      %212 = dma.done [#allocation9], 16
    $region81: #{aggregate_forward.1} parent=1 // pred_fallthru
      _
    // Predicated region
    $region82: #{aggregate_forward.1} parent=1 // pred_check
      _
    $region83: #{aggregate_forward.1} parent=1 // pred_check_branch
      %214 = sbr.rel (0) target = $region85
    $region84: #{aggregate_forward.1} parent=1 // pred_region
      %215 = dma.done [#allocation9], 16
    $region85: #{aggregate_forward.1} parent=1 // pred_fallthru
      _
    // Predicated region
    $region86: #{aggregate_forward.1} parent=1 // pred_check
      _
    $region87: #{aggregate_forward.1} parent=1 // pred_check_branch
      %217 = sbr.rel (0) target = $region89
    $region88: #{aggregate_forward.1} parent=1 // pred_region
      %218 = dma.done [#allocation12], 16
    $region89: #{aggregate_forward.1} parent=1 // pred_fallthru
      _
    // Predicated region
    $region90: #{aggregate_forward.1} parent=1 // pred_check
      _
    $region91: #{aggregate_forward.1} parent=1 // pred_check_branch
      %220 = sbr.rel (0) target = $region93
    $region92: #{aggregate_forward.1} parent=1 // pred_region
      %221 = dma.done [#allocation12], 256
    $region93: #{aggregate_forward.1} parent=1 // pred_fallthru
      _
    // Predicated region
    $region94: #{aggregate_forward.1} parent=1 // pred_check
      _
    $region95: #{aggregate_forward.1} parent=1 // pred_check_branch
      %223 = sbr.rel (0) target = $region97
    $region96: #{aggregate_forward.1} parent=1 // pred_region
      %224 = dma.done [#allocation15], 16
    $region97: #{aggregate_forward.1} parent=1 // pred_fallthru
      _
    // Predicated region
    $region98: #{aggregate_forward.1} parent=1 // pred_check
      _
    $region99: #{aggregate_forward.1} parent=1 // pred_check_branch
      %226 = sbr.rel (0) target = $region101
    $region100: #{aggregate_forward.1} parent=1 // pred_region
      %227 = dma.done [#allocation15], 32
    $region101: #{aggregate_forward.1} parent=1 // pred_fallthru
      _
    // Predicated region
    $region102: #{aggregate_forward.1} parent=1 // pred_check
      _
    $region103: #{aggregate_forward.1} parent=1 // pred_check_branch
      %229 = sbr.rel (0) target = $region105
    $region104: #{aggregate_forward.1} parent=1 // pred_region
      %230 = dma.done [#allocation18], 16
    $region105: #{aggregate_forward.1} parent=1 // pred_fallthru
      _
    // Predicated region
    $region106: #{aggregate_forward.1} parent=1 // pred_check
      _
    $region107: #{aggregate_forward.1} parent=1 // pred_check_branch
      %232 = sbr.rel (0) target = $region109
    $region108: #{aggregate_forward.1} parent=1 // pred_region
      %233 = dma.done [#allocation18], 16
    $region109: #{aggregate_forward.1} parent=1 // pred_fallthru
      _
    // Predicated region
    $region110: #{aggregate_forward.1} parent=1 // pred_check
      _
    $region111: #{aggregate_forward.1} parent=1 // pred_check_branch
      %235 = sbr.rel (0) target = $region113
    $region112: #{aggregate_forward.1} parent=1 // pred_region
      %236 = dma.done [#allocation21], 16
    $region113: #{aggregate_forward.1} parent=1 // pred_fallthru
      _
    // Predicated region
    $region114: #{aggregate_forward.1} parent=1 // pred_check
      _
    $region115: #{aggregate_forward.1} parent=1 // pred_check_branch
      %238 = sbr.rel (0) target = $region117
    $region116: #{aggregate_forward.1} parent=1 // pred_region
      %239 = dma.done [#allocation21], 768
    $region117: #{aggregate_forward.1} parent=1 // pred_fallthru
      _
    // Predicated region
    $region118: #{aggregate_forward.1} parent=1 // pred_check
      _
    $region119: #{aggregate_forward.1} parent=1 // pred_check_branch
      %241 = sbr.rel (0) target = $region121
    $region120: #{aggregate_forward.1} parent=1 // pred_region
      %242 = dma.done [#allocation24], 16
    $region121: #{aggregate_forward.1} parent=1 // pred_fallthru
      _
    // Predicated region
    $region122: #{aggregate_forward.1} parent=1 // pred_check
      _
    $region123: #{aggregate_forward.1} parent=1 // pred_check_branch
      %244 = sbr.rel (0) target = $region125
    $region124: #{aggregate_forward.1} parent=1 // pred_region
      %245 = dma.done [#allocation24], 16
    $region125: #{aggregate_forward.1} parent=1 // pred_fallthru
      _
    // Predicated region
    $region126: #{aggregate_forward.1} parent=1 // pred_check
      _
    $region127: #{aggregate_forward.1} parent=1 // pred_check_branch
      %247 = sbr.rel (0) target = $region129
    $region128: #{aggregate_forward.1} parent=1 // pred_region
      %248 = dma.done [#allocation27], 16
    $region129: #{aggregate_forward.1} parent=1 // pred_fallthru
      _
    %v250 = vld [vmem:[#allocation2] sm:$0xff]
    %v251 = vld [vmem:[#allocation2 + $0x8] sm:$0xff]
    %v252 = vld [vmem:[#allocation2 + $0x10] sm:$0xff]
    %v253 = vld [vmem:[#allocation2 + $0x18] sm:$0xff]
    %v254 = vlaneseq
    %v255 = vshrl.u32 %v254, 7
    %v256 = vadd.s32 %v255, 8
    %v257 = vld [vmem:[#allocation7] sm:$0xf]
    %v258 = vld [vmem:[#allocation7 + $0x4] sm:$0xf]
    %v259 = vld [vmem:[#allocation7 + $0x8] sm:$0xf]
    %v260 = vld [vmem:[#allocation7 + $0xc] sm:$0xf]
    %v261 = vpack.c.bf16 %v251, %v250
    %v262 = vpack.c.bf16 %v253, %v252
    %v263 = vld [vmem:[#allocation8] sm:$0x1]
    %v265 = vlaneseq
    %v266 = vshrl.u32 %v265, 7
    %v267 = vsub.s32 0, %v266
    %v268 = vrot.slane %v263, %v267
    %v274 = vunpack.c.l.b16 %v257
    %v275 = vunpack.c.l.b16 %v258
    %v276 = vunpack.c.l.b16 %v259
    %v277 = vunpack.c.l.b16 %v260
    %v278 = vpack.c.b16 %v275, %v274
    %v279 = vpack.c.b16 %v277, %v276
    %vm282 = vcmask 261120
    %v284 = vsel %vm282, %v261, 0
    %v287 = vsel %vm282, %v262, 0
    %289 = vmatprep.subr.bf16.mxu0 0
    %290 = vmatpush1.bf16.msra.mxu0 %v278
    %291 = vmatprep.subr.bf16.mxu0 0
    %292 = vmatpush1.bf16.msra.mxu0 %v279
    %293 = vmatprep.subr.bf16.mxu0 0
    %294 = vmatpush1.bf16.msra.mxu0 0
    %295 = vmatprep.subr.bf16.mxu0 0
    %296 = vmatpush1.bf16.msra.mxu0 0
    %297 = vmatprep.subr.bf16.mxu0 0
    %298 = vmatpush1.bf16.msra.mxu0 0
    %299 = vmatprep.subr.bf16.mxu0 0
    %300 = vmatpush1.bf16.msra.mxu0 0
    %301 = vmatprep.subr.bf16.mxu0 0
    %302 = vmatpush1.bf16.msra.mxu0 0
    %303 = vmatprep.subr.bf16.mxu0 0
    %304 = vmatpush1.bf16.msra.mxu0 0
    %305 = vmatprep.subr.bf16.mxu0 0
    %306 = vmatpush1.bf16.msra.mxu0 0
    %307 = vmatprep.subr.bf16.mxu0 0
    %308 = vmatpush1.bf16.msra.mxu0 0
    %309 = vmatprep.subr.bf16.mxu0 0
    %310 = vmatpush1.bf16.msra.mxu0 0
    %311 = vmatprep.subr.bf16.mxu0 0
    %312 = vmatpush1.bf16.msra.mxu0 0
    %313 = vmatprep.subr.bf16.mxu0 0
    %314 = vmatpush1.bf16.msra.mxu0 0
    %315 = vmatprep.subr.bf16.mxu0 0
    %316 = vmatpush1.bf16.msra.mxu0 0
    %317 = vmatprep.subr.bf16.mxu0 0
    %318 = vmatpush1.bf16.msra.mxu0 0
    %319 = vmatprep.subr.bf16.mxu0 0
    %320 = vmatpush1.bf16.msra.mxu0 0
    %321 = vmatprep.mubr.bf16.mxu0 0
    %322 = vmatmul.mubr.bf16.gmra.mrb[0].mxu0 %v284
    %v323 = vpop.f32.mrb[0].mxu0
    %v324 = vadd.f32 %v268, %v323
    %v325 = vpop.f32.mrb[0].mxu0
    %v326 = vpop.f32.mrb[0].mxu0
    %v327 = vadd.f32 %v268, %v326
    %v328 = vpop.f32.mrb[0].mxu0
    %329 = vmatprep.mubr.bf16.mxu0 0
    %330 = vmatmul.mubr.bf16.gmra.mrb[0].mxu0 %v287
    %v331 = vpop.f32.mrb[0].mxu0
    %v332 = vadd.f32 %v268, %v331
    %v333 = vpop.f32.mrb[0].mxu0
    %v334 = vpop.f32.mrb[0].mxu0
    %v335 = vadd.f32 %v268, %v334
    %v336 = vpop.f32.mrb[0].mxu0
    %337 = vdwg.mxu0
    %v338 = vrot.slane %v250, 7
    %v339 = vrot.slane %v252, 7
    %v340 = vrot.slane %v251, 7
    %v341 = vrot.slane %v253, 7
    %vm342 = vcmp.lt.s32.totalorder %v255, 1
    %v343 = vsel %vm342, %v338, %v340
    %v344 = vsel %vm342, %v339, %v341
    %v345 = vsel %vm342, %v340, %v338
    %v346 = vsel %vm342, %v341, %v339
    %vm347 = vcmp.ge.s32.totalorder %v255, 1
    %vm348 = vcmp.ge.s32.totalorder %v256, 1
    %v349 = vsel %vm347, 1, 0
    %v350 = vsel %vm348, 1, 0
    %vm351 = vcmp.eq.s32.totalorder %v349, 1
    %vm352 = vcmp.eq.s32.totalorder %v350, 1
    %v353 = vsel %vm351, %v345, 0.0
    %v354 = vsel %vm352, %v343, 0.0
    %v355 = vsel %vm351, %v346, 0.0
    %v356 = vsel %vm352, %v344, 0.0
    %v357 = vld [vmem:[#allocation5] sm:$0xf]
    %v358 = vld [vmem:[#allocation5 + $0x4] sm:$0xf]
    %v359 = vld [vmem:[#allocation5 + $0x8] sm:$0xf]
    %v360 = vld [vmem:[#allocation5 + $0xc] sm:$0xf]
    %v361 = vpack.c.bf16 %v354, %v353
    %v362 = vpack.c.bf16 %v356, %v355
    %v367 = vunpack.c.l.b16 %v357
    %v368 = vunpack.c.l.b16 %v358
    %v369 = vunpack.c.l.b16 %v359
    %v370 = vunpack.c.l.b16 %v360
    %v371 = vpack.c.b16 %v368, %v367
    %v372 = vpack.c.b16 %v370, %v369
    %v376 = vsel %vm282, %v361, 0
    %v379 = vsel %vm282, %v362, 0
    %381 = vmatprep.subr.bf16.mxu0 0
    %382 = vmatpush1.bf16.msra.mxu0 %v371
    %383 = vmatprep.subr.bf16.mxu0 0
    %384 = vmatpush1.bf16.msra.mxu0 %v372
    %385 = vmatprep.subr.bf16.mxu0 0
    %386 = vmatpush1.bf16.msra.mxu0 0
    %387 = vmatprep.subr.bf16.mxu0 0
    %388 = vmatpush1.bf16.msra.mxu0 0
    %389 = vmatprep.subr.bf16.mxu0 0
    %390 = vmatpush1.bf16.msra.mxu0 0
    %391 = vmatprep.subr.bf16.mxu0 0
    %392 = vmatpush1.bf16.msra.mxu0 0
    %393 = vmatprep.subr.bf16.mxu0 0
    %394 = vmatpush1.bf16.msra.mxu0 0
    %395 = vmatprep.subr.bf16.mxu0 0
    %396 = vmatpush1.bf16.msra.mxu0 0
    %397 = vmatprep.subr.bf16.mxu0 0
    %398 = vmatpush1.bf16.msra.mxu0 0
    %399 = vmatprep.subr.bf16.mxu0 0
    %400 = vmatpush1.bf16.msra.mxu0 0
    %401 = vmatprep.subr.bf16.mxu0 0
    %402 = vmatpush1.bf16.msra.mxu0 0
    %403 = vmatprep.subr.bf16.mxu0 0
    %404 = vmatpush1.bf16.msra.mxu0 0
    %405 = vmatprep.subr.bf16.mxu0 0
    %406 = vmatpush1.bf16.msra.mxu0 0
    %407 = vmatprep.subr.bf16.mxu0 0
    %408 = vmatpush1.bf16.msra.mxu0 0
    %409 = vmatprep.subr.bf16.mxu0 0
    %410 = vmatpush1.bf16.msra.mxu0 0
    %411 = vmatprep.subr.bf16.mxu0 0
    %412 = vmatpush1.bf16.msra.mxu0 0
    %413 = vmatprep.mubr.bf16.mxu0 0
    %414 = vmatmul.mubr.bf16.gmra.mrb[0].mxu0 %v376
    %v415 = vpop.f32.mrb[0].mxu0
    %v416 = vadd.f32 0.0, %v415
    %v417 = vpop.f32.mrb[0].mxu0
    %v418 = vpop.f32.mrb[0].mxu0
    %v419 = vadd.f32 0.0, %v418
    %v420 = vpop.f32.mrb[0].mxu0
    %421 = vmatprep.mubr.bf16.mxu0 0
    %422 = vmatmul.mubr.bf16.gmra.mrb[0].mxu0 %v379
    %v423 = vpop.f32.mrb[0].mxu0
    %v424 = vadd.f32 0.0, %v423
    %v425 = vpop.f32.mrb[0].mxu0
    %v426 = vpop.f32.mrb[0].mxu0
    %v427 = vadd.f32 0.0, %v426
    %v428 = vpop.f32.mrb[0].mxu0
    %429 = vdwg.mxu0
    %v430 = vadd.f32 %v324, %v416
    %v431 = vadd.f32 %v327, %v419
    %v432 = vadd.f32 %v332, %v424
    %v433 = vadd.f32 %v335, %v427
    %v434 = vrot.slane %v250, 1
    %v435 = vrot.slane %v252, 1
    %v436 = vrot.slane %v251, 1
    %v437 = vrot.slane %v253, 1
    %vm438 = vcmp.lt.s32.totalorder %v255, 7
    %v439 = vsel %vm438, %v434, %v436
    %v440 = vsel %vm438, %v435, %v437
    %v441 = vsel %vm438, %v436, %v434
    %v442 = vsel %vm438, %v437, %v435
    %vm443 = vcmp.lt.s32.totalorder %v255, 15
    %vm444 = vcmp.lt.s32.totalorder %v256, 15
    %v445 = vsel %vm443, 1, 0
    %v446 = vsel %vm444, 1, 0
    %vm447 = vcmp.eq.s32.totalorder %v445, 1
    %vm448 = vcmp.eq.s32.totalorder %v446, 1
    %v449 = vsel %vm447, %v439, 0.0
    %v450 = vsel %vm448, %v441, 0.0
    %v451 = vsel %vm447, %v440, 0.0
    %v452 = vsel %vm448, %v442, 0.0
    %s453 = scalar_lea.vmem [#allocation5], 16
    %v454 = vld [vmem:[%s453] sm:$0xf]
    %v455 = vld [vmem:[%s453 + $0x4] sm:$0xf]
    %v456 = vld [vmem:[%s453 + $0x8] sm:$0xf]
    %v457 = vld [vmem:[%s453 + $0xc] sm:$0xf]
    %v458 = vpack.c.bf16 %v450, %v449
    %v459 = vpack.c.bf16 %v452, %v451
    %v464 = vunpack.c.l.b16 %v454
    %v465 = vunpack.c.l.b16 %v455
    %v466 = vunpack.c.l.b16 %v456
    %v467 = vunpack.c.l.b16 %v457
    %v468 = vpack.c.b16 %v465, %v464
    %v469 = vpack.c.b16 %v467, %v466
    %v473 = vsel %vm282, %v458, 0
    %v476 = vsel %vm282, %v459, 0
    %478 = vmatprep.subr.bf16.mxu0 0
    %479 = vmatpush1.bf16.msra.mxu0 %v468
    %480 = vmatprep.subr.bf16.mxu0 0
    %481 = vmatpush1.bf16.msra.mxu0 %v469
    %482 = vmatprep.subr.bf16.mxu0 0
    %483 = vmatpush1.bf16.msra.mxu0 0
    %484 = vmatprep.subr.bf16.mxu0 0
    %485 = vmatpush1.bf16.msra.mxu0 0
    %486 = vmatprep.subr.bf16.mxu0 0
    %487 = vmatpush1.bf16.msra.mxu0 0
    %488 = vmatprep.subr.bf16.mxu0 0
    %489 = vmatpush1.bf16.msra.mxu0 0
    %490 = vmatprep.subr.bf16.mxu0 0
    %491 = vmatpush1.bf16.msra.mxu0 0
    %492 = vmatprep.subr.bf16.mxu0 0
    %493 = vmatpush1.bf16.msra.mxu0 0
    %494 = vmatprep.subr.bf16.mxu0 0
    %495 = vmatpush1.bf16.msra.mxu0 0
    %496 = vmatprep.subr.bf16.mxu0 0
    %497 = vmatpush1.bf16.msra.mxu0 0
    %498 = vmatprep.subr.bf16.mxu0 0
    %499 = vmatpush1.bf16.msra.mxu0 0
    %500 = vmatprep.subr.bf16.mxu0 0
    %501 = vmatpush1.bf16.msra.mxu0 0
    %502 = vmatprep.subr.bf16.mxu0 0
    %503 = vmatpush1.bf16.msra.mxu0 0
    %504 = vmatprep.subr.bf16.mxu0 0
    %505 = vmatpush1.bf16.msra.mxu0 0
    %506 = vmatprep.subr.bf16.mxu0 0
    %507 = vmatpush1.bf16.msra.mxu0 0
    %508 = vmatprep.subr.bf16.mxu0 0
    %509 = vmatpush1.bf16.msra.mxu0 0
    %510 = vmatprep.mubr.bf16.mxu0 0
    %511 = vmatmul.mubr.bf16.gmra.mrb[0].mxu0 %v473
    %v512 = vpop.f32.mrb[0].mxu0
    %v513 = vadd.f32 0.0, %v512
    %v514 = vpop.f32.mrb[0].mxu0
    %v515 = vpop.f32.mrb[0].mxu0
    %v516 = vadd.f32 0.0, %v515
    %v517 = vpop.f32.mrb[0].mxu0
    %518 = vmatprep.mubr.bf16.mxu0 0
    %519 = vmatmul.mubr.bf16.gmra.mrb[0].mxu0 %v476
    %v520 = vpop.f32.mrb[0].mxu0
    %v521 = vadd.f32 0.0, %v520
    %v522 = vpop.f32.mrb[0].mxu0
    %v523 = vpop.f32.mrb[0].mxu0
    %v524 = vadd.f32 0.0, %v523
    %v525 = vpop.f32.mrb[0].mxu0
    %526 = vdwg.mxu0
    %v527 = vadd.f32 %v430, %v513
    %v528 = vadd.f32 %v431, %v516
    %v529 = vadd.f32 %v432, %v521
    %v530 = vadd.f32 %v433, %v524
    %v531 = vrot.slane %v250, 6
    %v532 = vrot.slane %v252, 6
    %v533 = vrot.slane %v251, 6
    %v534 = vrot.slane %v253, 6
    %vm535 = vcmp.lt.s32.totalorder %v255, 2
    %v536 = vsel %vm535, %v531, %v533
    %v537 = vsel %vm535, %v532, %v534
    %v538 = vsel %vm535, %v533, %v531
    %v539 = vsel %vm535, %v534, %v532
    %vm540 = vcmp.ge.s32.totalorder %v255, 2
    %vm541 = vcmp.ge.s32.totalorder %v256, 2
    %v542 = vsel %vm540, 1, 0
    %v543 = vsel %vm541, 1, 0
    %vm544 = vcmp.eq.s32.totalorder %v542, 1
    %vm545 = vcmp.eq.s32.totalorder %v543, 1
    %v546 = vsel %vm544, %v538, 0.0
    %v547 = vsel %vm545, %v536, 0.0
    %v548 = vsel %vm544, %v539, 0.0
    %v549 = vsel %vm545, %v537, 0.0
    %s550 = scalar_lea.vmem [#allocation5], 32
    %v551 = vld [vmem:[%s550] sm:$0xf]
    %v552 = vld [vmem:[%s550 + $0x4] sm:$0xf]
    %v553 = vld [vmem:[%s550 + $0x8] sm:$0xf]
    %v554 = vld [vmem:[%s550 + $0xc] sm:$0xf]
    %v555 = vpack.c.bf16 %v547, %v546
    %v556 = vpack.c.bf16 %v549, %v548
    %v561 = vunpack.c.l.b16 %v551
    %v562 = vunpack.c.l.b16 %v552
    %v563 = vunpack.c.l.b16 %v553
    %v564 = vunpack.c.l.b16 %v554
    %v565 = vpack.c.b16 %v562, %v561
    %v566 = vpack.c.b16 %v564, %v563
    %v570 = vsel %vm282, %v555, 0
    %v573 = vsel %vm282, %v556, 0
    %575 = vmatprep.subr.bf16.mxu0 0
    %576 = vmatpush1.bf16.msra.mxu0 %v565
    %577 = vmatprep.subr.bf16.mxu0 0
    %578 = vmatpush1.bf16.msra.mxu0 %v566
    %579 = vmatprep.subr.bf16.mxu0 0
    %580 = vmatpush1.bf16.msra.mxu0 0
    %581 = vmatprep.subr.bf16.mxu0 0
    %582 = vmatpush1.bf16.msra.mxu0 0
    %583 = vmatprep.subr.bf16.mxu0 0
    %584 = vmatpush1.bf16.msra.mxu0 0
    %585 = vmatprep.subr.bf16.mxu0 0
    %586 = vmatpush1.bf16.msra.mxu0 0
    %587 = vmatprep.subr.bf16.mxu0 0
    %588 = vmatpush1.bf16.msra.mxu0 0
    %589 = vmatprep.subr.bf16.mxu0 0
    %590 = vmatpush1.bf16.msra.mxu0 0
    %591 = vmatprep.subr.bf16.mxu0 0
    %592 = vmatpush1.bf16.msra.mxu0 0
    %593 = vmatprep.subr.bf16.mxu0 0
    %594 = vmatpush1.bf16.msra.mxu0 0
    %595 = vmatprep.subr.bf16.mxu0 0
    %596 = vmatpush1.bf16.msra.mxu0 0
    %597 = vmatprep.subr.bf16.mxu0 0
    %598 = vmatpush1.bf16.msra.mxu0 0
    %599 = vmatprep.subr.bf16.mxu0 0
    %600 = vmatpush1.bf16.msra.mxu0 0
    %601 = vmatprep.subr.bf16.mxu0 0
    %602 = vmatpush1.bf16.msra.mxu0 0
    %603 = vmatprep.subr.bf16.mxu0 0
    %604 = vmatpush1.bf16.msra.mxu0 0
    %605 = vmatprep.subr.bf16.mxu0 0
    %606 = vmatpush1.bf16.msra.mxu0 0
    %607 = vmatprep.mubr.bf16.mxu0 0
    %608 = vmatmul.mubr.bf16.gmra.mrb[0].mxu0 %v570
    %v609 = vpop.f32.mrb[0].mxu0
    %v610 = vadd.f32 0.0, %v609
    %v611 = vpop.f32.mrb[0].mxu0
    %v612 = vpop.f32.mrb[0].mxu0
    %v613 = vadd.f32 0.0, %v612
    %v614 = vpop.f32.mrb[0].mxu0
    %615 = vmatprep.mubr.bf16.mxu0 0
    %616 = vmatmul.mubr.bf16.gmra.mrb[0].mxu0 %v573
    %v617 = vpop.f32.mrb[0].mxu0
    %v618 = vadd.f32 0.0, %v617
    %v619 = vpop.f32.mrb[0].mxu0
    %v620 = vpop.f32.mrb[0].mxu0
    %v621 = vadd.f32 0.0, %v620
    %v622 = vpop.f32.mrb[0].mxu0
    %623 = vdwg.mxu0
    %v624 = vadd.f32 %v527, %v610
    %v625 = vadd.f32 %v528, %v613
    %v626 = vadd.f32 %v529, %v618
    %v627 = vadd.f32 %v530, %v621
    %v628 = vrot.slane %v250, 2
    %v629 = vrot.slane %v252, 2
    %v630 = vrot.slane %v251, 2
    %v631 = vrot.slane %v253, 2
    %vm632 = vcmp.lt.s32.totalorder %v255, 6
    %v633 = vsel %vm632, %v628, %v630
    %v634 = vsel %vm632, %v629, %v631
    %v635 = vsel %vm632, %v630, %v628
    %v636 = vsel %vm632, %v631, %v629
    %vm637 = vcmp.lt.s32.totalorder %v255, 14
    %vm638 = vcmp.lt.s32.totalorder %v256, 14
    %v639 = vsel %vm637, 1, 0
    %v640 = vsel %vm638, 1, 0
    %vm641 = vcmp.eq.s32.totalorder %v639, 1
    %vm642 = vcmp.eq.s32.totalorder %v640, 1
    %v643 = vsel %vm641, %v633, 0.0
    %v644 = vsel %vm642, %v635, 0.0
    %v645 = vsel %vm641, %v634, 0.0
    %v646 = vsel %vm642, %v636, 0.0
    %s647 = scalar_lea.vmem [#allocation5], 48
    %v648 = vld [vmem:[%s647] sm:$0xf]
    %v649 = vld [vmem:[%s647 + $0x4] sm:$0xf]
    %v650 = vld [vmem:[%s647 + $0x8] sm:$0xf]
    %v651 = vld [vmem:[%s647 + $0xc] sm:$0xf]
    %v652 = vpack.c.bf16 %v644, %v643
    %v653 = vpack.c.bf16 %v646, %v645
    %v658 = vunpack.c.l.b16 %v648
    %v659 = vunpack.c.l.b16 %v649
    %v660 = vunpack.c.l.b16 %v650
    %v661 = vunpack.c.l.b16 %v651
    %v662 = vpack.c.b16 %v659, %v658
    %v663 = vpack.c.b16 %v661, %v660
    %v667 = vsel %vm282, %v652, 0
    %v670 = vsel %vm282, %v653, 0
    %672 = vmatprep.subr.bf16.mxu0 0
    %673 = vmatpush1.bf16.msra.mxu0 %v662
    %674 = vmatprep.subr.bf16.mxu0 0
    %675 = vmatpush1.bf16.msra.mxu0 %v663
    %676 = vmatprep.subr.bf16.mxu0 0
    %677 = vmatpush1.bf16.msra.mxu0 0
    %678 = vmatprep.subr.bf16.mxu0 0
    %679 = vmatpush1.bf16.msra.mxu0 0
    %680 = vmatprep.subr.bf16.mxu0 0
    %681 = vmatpush1.bf16.msra.mxu0 0
    %682 = vmatprep.subr.bf16.mxu0 0
    %683 = vmatpush1.bf16.msra.mxu0 0
    %684 = vmatprep.subr.bf16.mxu0 0
    %685 = vmatpush1.bf16.msra.mxu0 0
    %686 = vmatprep.subr.bf16.mxu0 0
    %687 = vmatpush1.bf16.msra.mxu0 0
    %688 = vmatprep.subr.bf16.mxu0 0
    %689 = vmatpush1.bf16.msra.mxu0 0
    %690 = vmatprep.subr.bf16.mxu0 0
    %691 = vmatpush1.bf16.msra.mxu0 0
    %692 = vmatprep.subr.bf16.mxu0 0
    %693 = vmatpush1.bf16.msra.mxu0 0
    %694 = vmatprep.subr.bf16.mxu0 0
    %695 = vmatpush1.bf16.msra.mxu0 0
    %696 = vmatprep.subr.bf16.mxu0 0
    %697 = vmatpush1.bf16.msra.mxu0 0
    %698 = vmatprep.subr.bf16.mxu0 0
    %699 = vmatpush1.bf16.msra.mxu0 0
    %700 = vmatprep.subr.bf16.mxu0 0
    %701 = vmatpush1.bf16.msra.mxu0 0
    %702 = vmatprep.subr.bf16.mxu0 0
    %703 = vmatpush1.bf16.msra.mxu0 0
    %704 = vmatprep.mubr.bf16.mxu0 0
    %705 = vmatmul.mubr.bf16.gmra.mrb[0].mxu0 %v667
    %v706 = vpop.f32.mrb[0].mxu0
    %v707 = vadd.f32 0.0, %v706
    %v708 = vpop.f32.mrb[0].mxu0
    %v709 = vpop.f32.mrb[0].mxu0
    %v710 = vadd.f32 0.0, %v709
    %v711 = vpop.f32.mrb[0].mxu0
    %712 = vmatprep.mubr.bf16.mxu0 0
    %713 = vmatmul.mubr.bf16.gmra.mrb[0].mxu0 %v670
    %v714 = vpop.f32.mrb[0].mxu0
    %v715 = vadd.f32 0.0, %v714
    %v716 = vpop.f32.mrb[0].mxu0
    %v717 = vpop.f32.mrb[0].mxu0
    %v718 = vadd.f32 0.0, %v717
    %v719 = vpop.f32.mrb[0].mxu0
    %720 = vdwg.mxu0
    %v721 = vadd.f32 %v624, %v707
    %v722 = vadd.f32 %v625, %v710
    %v723 = vadd.f32 %v626, %v715
    %v724 = vadd.f32 %v627, %v718
    %v725 = vrot.slane %v250, 4
    %v726 = vrot.slane %v252, 4
    %v727 = vrot.slane %v251, 4
    %v728 = vrot.slane %v253, 4
    %vm729 = vcmp.lt.s32.totalorder %v255, 4
    %v730 = vsel %vm729, %v725, %v727
    %v731 = vsel %vm729, %v726, %v728
    %v732 = vsel %vm729, %v727, %v725
    %v733 = vsel %vm729, %v728, %v726
    %vm734 = vcmp.ge.s32.totalorder %v255, 4
    %vm735 = vcmp.ge.s32.totalorder %v256, 4
    %v736 = vsel %vm734, 1, 0
    %v737 = vsel %vm735, 1, 0
    %vm738 = vcmp.eq.s32.totalorder %v736, 1
    %vm739 = vcmp.eq.s32.totalorder %v737, 1
    %v740 = vsel %vm738, %v732, 0.0
    %v741 = vsel %vm739, %v730, 0.0
    %v742 = vsel %vm738, %v733, 0.0
    %v743 = vsel %vm739, %v731, 0.0
    %s744 = scalar_lea.vmem [#allocation5], 64
    %v745 = vld [vmem:[%s744] sm:$0xf]
    %v746 = vld [vmem:[%s744 + $0x4] sm:$0xf]
    %v747 = vld [vmem:[%s744 + $0x8] sm:$0xf]
    %v748 = vld [vmem:[%s744 + $0xc] sm:$0xf]
    %v749 = vpack.c.bf16 %v741, %v740
    %v750 = vpack.c.bf16 %v743, %v742
    %v755 = vunpack.c.l.b16 %v745
    %v756 = vunpack.c.l.b16 %v746
    %v757 = vunpack.c.l.b16 %v747
    %v758 = vunpack.c.l.b16 %v748
    %v759 = vpack.c.b16 %v756, %v755
    %v760 = vpack.c.b16 %v758, %v757
    %v764 = vsel %vm282, %v749, 0
    %v767 = vsel %vm282, %v750, 0
    %769 = vmatprep.subr.bf16.mxu0 0
    %770 = vmatpush1.bf16.msra.mxu0 %v759
    %771 = vmatprep.subr.bf16.mxu0 0
    %772 = vmatpush1.bf16.msra.mxu0 %v760
    %773 = vmatprep.subr.bf16.mxu0 0
    %774 = vmatpush1.bf16.msra.mxu0 0
    %775 = vmatprep.subr.bf16.mxu0 0
    %776 = vmatpush1.bf16.msra.mxu0 0
    %777 = vmatprep.subr.bf16.mxu0 0
    %778 = vmatpush1.bf16.msra.mxu0 0
    %779 = vmatprep.subr.bf16.mxu0 0
    %780 = vmatpush1.bf16.msra.mxu0 0
    %781 = vmatprep.subr.bf16.mxu0 0
    %782 = vmatpush1.bf16.msra.mxu0 0
    %783 = vmatprep.subr.bf16.mxu0 0
    %784 = vmatpush1.bf16.msra.mxu0 0
    %785 = vmatprep.subr.bf16.mxu0 0
    %786 = vmatpush1.bf16.msra.mxu0 0
    %787 = vmatprep.subr.bf16.mxu0 0
    %788 = vmatpush1.bf16.msra.mxu0 0
    %789 = vmatprep.subr.bf16.mxu0 0
    %790 = vmatpush1.bf16.msra.mxu0 0
    %791 = vmatprep.subr.bf16.mxu0 0
    %792 = vmatpush1.bf16.msra.mxu0 0
    %793 = vmatprep.subr.bf16.mxu0 0
    %794 = vmatpush1.bf16.msra.mxu0 0
    %795 = vmatprep.subr.bf16.mxu0 0
    %796 = vmatpush1.bf16.msra.mxu0 0
    %797 = vmatprep.subr.bf16.mxu0 0
    %798 = vmatpush1.bf16.msra.mxu0 0
    %799 = vmatprep.subr.bf16.mxu0 0
    %800 = vmatpush1.bf16.msra.mxu0 0
    %801 = vmatprep.mubr.bf16.mxu0 0
    %802 = vmatmul.mubr.bf16.gmra.mrb[0].mxu0 %v764
    %v803 = vpop.f32.mrb[0].mxu0
    %v804 = vadd.f32 0.0, %v803
    %v805 = vpop.f32.mrb[0].mxu0
    %v806 = vpop.f32.mrb[0].mxu0
    %v807 = vadd.f32 0.0, %v806
    %v808 = vpop.f32.mrb[0].mxu0
    %809 = vmatprep.mubr.bf16.mxu0 0
    %810 = vmatmul.mubr.bf16.gmra.mrb[0].mxu0 %v767
    %v811 = vpop.f32.mrb[0].mxu0
    %v812 = vadd.f32 0.0, %v811
    %v813 = vpop.f32.mrb[0].mxu0
    %v814 = vpop.f32.mrb[0].mxu0
    %v815 = vadd.f32 0.0, %v814
    %v816 = vpop.f32.mrb[0].mxu0
    %817 = vdwg.mxu0
    %v818 = vadd.f32 %v721, %v804
    %v819 = vadd.f32 %v722, %v807
    %v820 = vadd.f32 %v723, %v812
    %v821 = vadd.f32 %v724, %v815
    %vm822 = vcmp.lt.s32.totalorder %v255, 12
    %vm823 = vcmp.lt.s32.totalorder %v256, 12
    %v824 = vsel %vm822, 1, 0
    %v825 = vsel %vm823, 1, 0
    %vm826 = vcmp.eq.s32.totalorder %v824, 1
    %vm827 = vcmp.eq.s32.totalorder %v825, 1
    %v828 = vsel %vm826, %v730, 0.0
    %v829 = vsel %vm827, %v732, 0.0
    %v830 = vsel %vm826, %v731, 0.0
    %v831 = vsel %vm827, %v733, 0.0
    %s832 = scalar_lea.vmem [#allocation5], 80
    %v833 = vld [vmem:[%s832] sm:$0xf]
    %v834 = vld [vmem:[%s832 + $0x4] sm:$0xf]
    %v835 = vld [vmem:[%s832 + $0x8] sm:$0xf]
    %v836 = vld [vmem:[%s832 + $0xc] sm:$0xf]
    %v837 = vpack.c.bf16 %v829, %v828
    %v838 = vpack.c.bf16 %v831, %v830
    %v843 = vunpack.c.l.b16 %v833
    %v844 = vunpack.c.l.b16 %v834
    %v845 = vunpack.c.l.b16 %v835
    %v846 = vunpack.c.l.b16 %v836
    %v847 = vpack.c.b16 %v844, %v843
    %v848 = vpack.c.b16 %v846, %v845
    %v852 = vsel %vm282, %v837, 0
    %v855 = vsel %vm282, %v838, 0
    %857 = vmatprep.subr.bf16.mxu0 0
    %858 = vmatpush1.bf16.msra.mxu0 %v847
    %859 = vmatprep.subr.bf16.mxu0 0
    %860 = vmatpush1.bf16.msra.mxu0 %v848
    %861 = vmatprep.subr.bf16.mxu0 0
    %862 = vmatpush1.bf16.msra.mxu0 0
    %863 = vmatprep.subr.bf16.mxu0 0
    %864 = vmatpush1.bf16.msra.mxu0 0
    %865 = vmatprep.subr.bf16.mxu0 0
    %866 = vmatpush1.bf16.msra.mxu0 0
    %867 = vmatprep.subr.bf16.mxu0 0
    %868 = vmatpush1.bf16.msra.mxu0 0
    %869 = vmatprep.subr.bf16.mxu0 0
    %870 = vmatpush1.bf16.msra.mxu0 0
    %871 = vmatprep.subr.bf16.mxu0 0
    %872 = vmatpush1.bf16.msra.mxu0 0
    %873 = vmatprep.subr.bf16.mxu0 0
    %874 = vmatpush1.bf16.msra.mxu0 0
    %875 = vmatprep.subr.bf16.mxu0 0
    %876 = vmatpush1.bf16.msra.mxu0 0
    %877 = vmatprep.subr.bf16.mxu0 0
    %878 = vmatpush1.bf16.msra.mxu0 0
    %879 = vmatprep.subr.bf16.mxu0 0
    %880 = vmatpush1.bf16.msra.mxu0 0
    %881 = vmatprep.subr.bf16.mxu0 0
    %882 = vmatpush1.bf16.msra.mxu0 0
    %883 = vmatprep.subr.bf16.mxu0 0
    %884 = vmatpush1.bf16.msra.mxu0 0
    %885 = vmatprep.subr.bf16.mxu0 0
    %886 = vmatpush1.bf16.msra.mxu0 0
    %887 = vmatprep.subr.bf16.mxu0 0
    %888 = vmatpush1.bf16.msra.mxu0 0
    %889 = vmatprep.mubr.bf16.mxu0 0
    %890 = vmatmul.mubr.bf16.gmra.mrb[0].mxu0 %v852
    %v891 = vpop.f32.mrb[0].mxu0
    %v892 = vadd.f32 0.0, %v891
    %v893 = vpop.f32.mrb[0].mxu0
    %v894 = vpop.f32.mrb[0].mxu0
    %v895 = vadd.f32 0.0, %v894
    %v896 = vpop.f32.mrb[0].mxu0
    %897 = vmatprep.mubr.bf16.mxu0 0
    %898 = vmatmul.mubr.bf16.gmra.mrb[0].mxu0 %v855
    %v899 = vpop.f32.mrb[0].mxu0
    %v900 = vadd.f32 0.0, %v899
    %v901 = vpop.f32.mrb[0].mxu0
    %v902 = vpop.f32.mrb[0].mxu0
    %v903 = vadd.f32 0.0, %v902
    %v904 = vpop.f32.mrb[0].mxu0
    %905 = vdwg.mxu0
    %v906 = vadd.f32 %v818, %v892
    %v907 = vadd.f32 %v819, %v895
    %v908 = vadd.f32 %v820, %v900
    %v909 = vadd.f32 %v821, %v903
    %v910 = vmax.f32 %v906, 0.0
    %v911 = vmax.f32 %v907, 0.0
    %v912 = vmax.f32 %v908, 0.0
    %v913 = vmax.f32 %v909, 0.0
    %v914 = vsel %vm282, %v910, 0.0
    %v915 = vsel %vm282, %v911, 0.0
    %v916 = vadd.f32 %v914, %v915
    %v917 = vsel %vm282, %v912, 0.0
    %v918 = vadd.f32 %v916, %v917
    %v919 = vsel %vm282, %v913, 0.0
    %v920 = vadd.f32 %v918, %v919
    %v921 = vrot.slane %v920, 4
    %v922 = vadd.f32 %v920, %v921
    %v923 = vrot.slane %v922, 2
    %v924 = vadd.f32 %v922, %v923
    %v925 = vrot.slane %v924, 1
    %v926 = vadd.f32 %v924, %v925
    %v927 = vmul.f32 %v910, %v910
    %v928 = vmul.f32 %v911, %v911
    %v929 = vmul.f32 %v912, %v912
    %v930 = vmul.f32 %v913, %v913
    %v931 = vsel %vm282, %v927, 0.0
    %v932 = vsel %vm282, %v928, 0.0
    %v933 = vadd.f32 %v931, %v932
    %v934 = vsel %vm282, %v929, 0.0
    %v935 = vadd.f32 %v933, %v934
    %v936 = vsel %vm282, %v930, 0.0
    %v937 = vadd.f32 %v935, %v936
    %v938 = vrot.slane %v937, 4
    %v939 = vadd.f32 %v937, %v938
    %v940 = vrot.slane %v939, 2
    %v941 = vadd.f32 %v939, %v940
    %v942 = vrot.slane %v941, 1
    %v943 = vadd.f32 %v941, %v942
    %v944 = vrcp.pop 32.0
    %v945 = vmul.f32 %v926, %v944
    %v946 = vmul.f32 %v943, %v944
    %v947 = vmul.f32 %v945, %v945
    %v948 = vsub.f32 %v946, %v947
    %v949 = vmax.f32 %v948, 0.0
    %v950 = vadd.f32 %v949, 1e-05
    %v951 = vrsqrt.pop %v950
    %v952 = vlaneseq
    %v953 = vand.u32 %v952, 127
    %vm954 = vcmp.lt.s32.totalorder %v953, 24
    %v955 = vld [vmem:[#allocation10] sm:$0x1]
    %v956 = vmul.f32 %v955, %v951
    %v957 = vsel %vm954, %v956, 1.0
    %v958 = vld [vmem:[#allocation11] sm:$0x1]
    %v959 = vmul.f32 %v945, %v955
    %v960 = vmul.f32 %v959, %v951
    %v961 = vsub.f32 %v958, %v960
    %v962 = vsel %vm954, %v961, 0.0
    %v963 = vlaneseq
    %v964 = vshrl.u32 %v963, 7
    %v965 = vsub.s32 0, %v964
    %v966 = vrot.slane %v957, %v965
    %v967 = vmul.f32 %v910, %v966
    %v968 = vmul.f32 %v911, %v966
    %v969 = vmul.f32 %v912, %v966
    %v970 = vmul.f32 %v913, %v966
    %v971 = vlaneseq
    %v972 = vshrl.u32 %v971, 7
    %v973 = vsub.s32 0, %v972
    %v974 = vrot.slane %v962, %v973
    %v975 = vadd.f32 %v967, %v974
    %v976 = vadd.f32 %v968, %v974
    %v977 = vadd.f32 %v969, %v974
    %v978 = vadd.f32 %v970, %v974
    %v979 = vld [vmem:[#allocation13] sm:$0xf]
    %v980 = vld [vmem:[#allocation13 + $0x4] sm:$0xf]
    %v981 = vld [vmem:[#allocation13 + $0x8] sm:$0xf]
    %v982 = vld [vmem:[#allocation13 + $0xc] sm:$0xf]
    %v983 = vpack.c.bf16 %v976, %v975
    %v984 = vpack.c.bf16 %v978, %v977
    %v985 = vld [vmem:[#allocation14] sm:$0x1]
    %v987 = vlaneseq
    %v988 = vshrl.u32 %v987, 7
    %v989 = vsub.s32 0, %v988
    %v990 = vrot.slane %v985, %v989
    %v996 = vunpack.c.l.b16 %v979
    %v997 = vunpack.c.l.b16 %v980
    %v998 = vunpack.c.l.b16 %v981
    %v999 = vunpack.c.l.b16 %v982
    %v1000 = vpack.c.b16 %v997, %v996
    %v1001 = vpack.c.b16 %v999, %v998
    %v1005 = vsel %vm282, %v983, 0
    %v1008 = vsel %vm282, %v984, 0
    %1010 = vmatprep.subr.bf16.mxu0 0
    %1011 = vmatpush1.bf16.msra.mxu0 %v1000
    %1012 = vmatprep.subr.bf16.mxu0 0
    %1013 = vmatpush1.bf16.msra.mxu0 %v1001
    %1014 = vmatprep.subr.bf16.mxu0 0
    %1015 = vmatpush1.bf16.msra.mxu0 0
    %1016 = vmatprep.subr.bf16.mxu0 0
    %1017 = vmatpush1.bf16.msra.mxu0 0
    %1018 = vmatprep.subr.bf16.mxu0 0
    %1019 = vmatpush1.bf16.msra.mxu0 0
    %1020 = vmatprep.subr.bf16.mxu0 0
    %1021 = vmatpush1.bf16.msra.mxu0 0
    %1022 = vmatprep.subr.bf16.mxu0 0
    %1023 = vmatpush1.bf16.msra.mxu0 0
    %1024 = vmatprep.subr.bf16.mxu0 0
    %1025 = vmatpush1.bf16.msra.mxu0 0
    %1026 = vmatprep.subr.bf16.mxu0 0
    %1027 = vmatpush1.bf16.msra.mxu0 0
    %1028 = vmatprep.subr.bf16.mxu0 0
    %1029 = vmatpush1.bf16.msra.mxu0 0
    %1030 = vmatprep.subr.bf16.mxu0 0
    %1031 = vmatpush1.bf16.msra.mxu0 0
    %1032 = vmatprep.subr.bf16.mxu0 0
    %1033 = vmatpush1.bf16.msra.mxu0 0
    %1034 = vmatprep.subr.bf16.mxu0 0
    %1035 = vmatpush1.bf16.msra.mxu0 0
    %1036 = vmatprep.subr.bf16.mxu0 0
    %1037 = vmatpush1.bf16.msra.mxu0 0
    %1038 = vmatprep.subr.bf16.mxu0 0
    %1039 = vmatpush1.bf16.msra.mxu0 0
    %1040 = vmatprep.subr.bf16.mxu0 0
    %1041 = vmatpush1.bf16.msra.mxu0 0
    %1042 = vmatprep.mubr.bf16.mxu0 0
    %1043 = vmatmul.mubr.bf16.gmra.mrb[0].mxu0 %v1005
    %v1044 = vpop.f32.mrb[0].mxu0
    %v1045 = vadd.f32 %v990, %v1044
    %v1046 = vpop.f32.mrb[0].mxu0
    %v1047 = vpop.f32.mrb[0].mxu0
    %v1048 = vadd.f32 %v990, %v1047
    %v1049 = vpop.f32.mrb[0].mxu0
    %1050 = vmatprep.mubr.bf16.mxu0 0
    %1051 = vmatmul.mubr.bf16.gmra.mrb[0].mxu0 %v1008
    %v1052 = vpop.f32.mrb[0].mxu0
    %v1053 = vadd.f32 %v990, %v1052
    %v1054 = vpop.f32.mrb[0].mxu0
    %v1055 = vpop.f32.mrb[0].mxu0
    %v1056 = vadd.f32 %v990, %v1055
    %v1057 = vpop.f32.mrb[0].mxu0
    %1058 = vdwg.mxu0
    %v1059 = vmul.f32 %v1045, 0.0625
    %v1060 = vmul.f32 %v1048, 0.0625
    %v1061 = vmul.f32 %v1053, 0.0625
    %v1062 = vmul.f32 %v1056, 0.0625
    %v1063 = vpack.c.bf16 %v1060, %v1059
    %v1064 = vpack.c.bf16 %v1062, %v1061
    %v1065 = vpack.c.bf16 %v1048, %v1045
    %v1066 = vpack.c.bf16 %v1056, %v1053
    %1068 = vrot.lane.b32.xlu0 %v1065, 124
    %v1069 = vpop.permute.xlu0 %1068
    %vm1070 = vcmask 31744
    %v1072 = vsel %vm1070, %v1063, 0
    %v1075 = vsel %vm1070, %v1069, 0
    %1077 = vmatprep.subr.bf16.mxu0 0
    %1078 = vmatpush1.bf16.xpose.msra.mxu0 %v1075
    %1079 = vmatprep.subr.bf16.mxu0 0
    %1080 = vmatpush1.bf16.xpose.msra.mxu0 0
    %1081 = vmatprep.subr.bf16.mxu0 0
    %1082 = vmatpush1.bf16.xpose.msra.mxu0 0
    %1083 = vmatprep.subr.bf16.mxu0 0
    %1084 = vmatpush1.bf16.xpose.msra.mxu0 0
    %1085 = vmatprep.subr.bf16.mxu0 0
    %1086 = vmatpush1.bf16.xpose.msra.mxu0 0
    %1087 = vmatprep.subr.bf16.mxu0 0
    %1088 = vmatpush1.bf16.xpose.msra.mxu0 0
    %1089 = vmatprep.subr.bf16.mxu0 0
    %1090 = vmatpush1.bf16.xpose.msra.mxu0 0
    %1091 = vmatprep.subr.bf16.mxu0 0
    %1092 = vmatpush1.bf16.xpose.msra.mxu0 0
    %1093 = vmatprep.subr.bf16.mxu0 0
    %1094 = vmatpush1.bf16.xpose.msra.mxu0 0
    %1095 = vmatprep.subr.bf16.mxu0 0
    %1096 = vmatpush1.bf16.xpose.msra.mxu0 0
    %1097 = vmatprep.subr.bf16.mxu0 0
    %1098 = vmatpush1.bf16.xpose.msra.mxu0 0
    %1099 = vmatprep.subr.bf16.mxu0 0
    %1100 = vmatpush1.bf16.xpose.msra.mxu0 0
    %1101 = vmatprep.subr.bf16.mxu0 0
    %1102 = vmatpush1.bf16.xpose.msra.mxu0 0
    %1103 = vmatprep.subr.bf16.mxu0 0
    %1104 = vmatpush1.bf16.xpose.msra.mxu0 0
    %1105 = vmatprep.subr.bf16.mxu0 0
    %1106 = vmatpush1.bf16.xpose.msra.mxu0 0
    %1107 = vmatprep.subr.bf16.mxu0 0
    %1108 = vmatpush1.bf16.xpose.msra.mxu0 0
    %1109 = vmatprep.mubr.bf16.mxu0 0
    %1110 = vmatmul.mubr.bf16.gmra.mrb[0].mxu0 %v1072
    %v1111 = vpop.f32.mrb[0].mxu0
    %v1112 = vadd.f32 0.0, %v1111
    %v1113 = vpop.f32.mrb[0].mxu0
    %v1114 = vpop.f32.mrb[0].mxu0
    %v1115 = vadd.f32 0.0, %v1114
    %v1116 = vpop.f32.mrb[0].mxu0
    %1117 = vdwg.mxu0
    %1119 = vrot.lane.b32.xlu0 %v1066, 124
    %v1120 = vpop.permute.xlu0 %1119
    %v1122 = vsel %vm1070, %v1064, 0
    %v1125 = vsel %vm1070, %v1120, 0
    %1127 = vmatprep.subr.bf16.mxu0 0
    %1128 = vmatpush1.bf16.xpose.msra.mxu0 %v1125
    %1129 = vmatprep.subr.bf16.mxu0 0
    %1130 = vmatpush1.bf16.xpose.msra.mxu0 0
    %1131 = vmatprep.subr.bf16.mxu0 0
    %1132 = vmatpush1.bf16.xpose.msra.mxu0 0
    %1133 = vmatprep.subr.bf16.mxu0 0
    %1134 = vmatpush1.bf16.xpose.msra.mxu0 0
    %1135 = vmatprep.subr.bf16.mxu0 0
    %1136 = vmatpush1.bf16.xpose.msra.mxu0 0
    %1137 = vmatprep.subr.bf16.mxu0 0
    %1138 = vmatpush1.bf16.xpose.msra.mxu0 0
    %1139 = vmatprep.subr.bf16.mxu0 0
    %1140 = vmatpush1.bf16.xpose.msra.mxu0 0
    %1141 = vmatprep.subr.bf16.mxu0 0
    %1142 = vmatpush1.bf16.xpose.msra.mxu0 0
    %1143 = vmatprep.subr.bf16.mxu0 0
    %1144 = vmatpush1.bf16.xpose.msra.mxu0 0
    %1145 = vmatprep.subr.bf16.mxu0 0
    %1146 = vmatpush1.bf16.xpose.msra.mxu0 0
    %1147 = vmatprep.subr.bf16.mxu0 0
    %1148 = vmatpush1.bf16.xpose.msra.mxu0 0
    %1149 = vmatprep.subr.bf16.mxu0 0
    %1150 = vmatpush1.bf16.xpose.msra.mxu0 0
    %1151 = vmatprep.subr.bf16.mxu0 0
    %1152 = vmatpush1.bf16.xpose.msra.mxu0 0
    %1153 = vmatprep.subr.bf16.mxu0 0
    %1154 = vmatpush1.bf16.xpose.msra.mxu0 0
    %1155 = vmatprep.subr.bf16.mxu0 0
    %1156 = vmatpush1.bf16.xpose.msra.mxu0 0
    %1157 = vmatprep.subr.bf16.mxu0 0
    %1158 = vmatpush1.bf16.xpose.msra.mxu0 0
    %1159 = vmatprep.mubr.bf16.mxu0 0
    %1160 = vmatmul.mubr.bf16.gmra.mrb[0].mxu0 %v1122
    %v1161 = vpop.f32.mrb[0].mxu0
    %v1162 = vadd.f32 0.0, %v1161
    %v1163 = vpop.f32.mrb[0].mxu0
    %v1164 = vpop.f32.mrb[0].mxu0
    %v1165 = vadd.f32 0.0, %v1164
    %v1166 = vpop.f32.mrb[0].mxu0
    %1167 = vdwg.mxu0
    %v1168 = vpack.c.bf16 %v1115, %v1112
    %v1169 = vpack.c.bf16 %v1165, %v1162
    %1170 = vrot.lane.b32.xlu0 %v1065, 120
    %v1171 = vpop.permute.xlu0 %1170
    %vm1173 = vcmask 130048
    %v1175 = vsel %vm1173, %v1168, 0
    %1177 = vmatprep.subr.bf16.mxu0 0
    %1178 = vmatpush1.bf16.msra.mxu0 %v1171
    %1179 = vmatprep.subr.bf16.mxu0 0
    %1180 = vmatpush1.bf16.msra.mxu0 0
    %1181 = vmatprep.subr.bf16.mxu0 0
    %1182 = vmatpush1.bf16.msra.mxu0 0
    %1183 = vmatprep.subr.bf16.mxu0 0
    %1184 = vmatpush1.bf16.msra.mxu0 0
    %1185 = vmatprep.subr.bf16.mxu0 0
    %1186 = vmatpush1.bf16.msra.mxu0 0
    %1187 = vmatprep.subr.bf16.mxu0 0
    %1188 = vmatpush1.bf16.msra.mxu0 0
    %1189 = vmatprep.subr.bf16.mxu0 0
    %1190 = vmatpush1.bf16.msra.mxu0 0
    %1191 = vmatprep.subr.bf16.mxu0 0
    %1192 = vmatpush1.bf16.msra.mxu0 0
    %1193 = vmatprep.subr.bf16.mxu0 0
    %1194 = vmatpush1.bf16.msra.mxu0 0
    %1195 = vmatprep.subr.bf16.mxu0 0
    %1196 = vmatpush1.bf16.msra.mxu0 0
    %1197 = vmatprep.subr.bf16.mxu0 0
    %1198 = vmatpush1.bf16.msra.mxu0 0
    %1199 = vmatprep.subr.bf16.mxu0 0
    %1200 = vmatpush1.bf16.msra.mxu0 0
    %1201 = vmatprep.subr.bf16.mxu0 0
    %1202 = vmatpush1.bf16.msra.mxu0 0
    %1203 = vmatprep.subr.bf16.mxu0 0
    %1204 = vmatpush1.bf16.msra.mxu0 0
    %1205 = vmatprep.subr.bf16.mxu0 0
    %1206 = vmatpush1.bf16.msra.mxu0 0
    %1207 = vmatprep.subr.bf16.mxu0 0
    %1208 = vmatpush1.bf16.msra.mxu0 0
    %1209 = vmatprep.mubr.bf16.mxu0 0
    %1210 = vmatmul.mubr.bf16.gmra.mrb[0].mxu0 %v1175
    %v1211 = vpop.f32.mrb[0].mxu0
    %v1212 = vadd.f32 0.0, %v1211
    %v1213 = vpop.f32.mrb[0].mxu0
    %v1214 = vpop.f32.mrb[0].mxu0
    %v1215 = vadd.f32 0.0, %v1214
    %v1216 = vpop.f32.mrb[0].mxu0
    %1217 = vdwg.mxu0
    %1218 = vrot.lane.b32.xlu0 %v1066, 120
    %v1219 = vpop.permute.xlu0 %1218
    %v1222 = vsel %vm1173, %v1169, 0
    %1224 = vmatprep.subr.bf16.mxu0 0
    %1225 = vmatpush1.bf16.msra.mxu0 %v1219
    %1226 = vmatprep.subr.bf16.mxu0 0
    %1227 = vmatpush1.bf16.msra.mxu0 0
    %1228 = vmatprep.subr.bf16.mxu0 0
    %1229 = vmatpush1.bf16.msra.mxu0 0
    %1230 = vmatprep.subr.bf16.mxu0 0
    %1231 = vmatpush1.bf16.msra.mxu0 0
    %1232 = vmatprep.subr.bf16.mxu0 0
    %1233 = vmatpush1.bf16.msra.mxu0 0
    %1234 = vmatprep.subr.bf16.mxu0 0
    %1235 = vmatpush1.bf16.msra.mxu0 0
    %1236 = vmatprep.subr.bf16.mxu0 0
    %1237 = vmatpush1.bf16.msra.mxu0 0
    %1238 = vmatprep.subr.bf16.mxu0 0
    %1239 = vmatpush1.bf16.msra.mxu0 0
    %1240 = vmatprep.subr.bf16.mxu0 0
    %1241 = vmatpush1.bf16.msra.mxu0 0
    %1242 = vmatprep.subr.bf16.mxu0 0
    %1243 = vmatpush1.bf16.msra.mxu0 0
    %1244 = vmatprep.subr.bf16.mxu0 0
    %1245 = vmatpush1.bf16.msra.mxu0 0
    %1246 = vmatprep.subr.bf16.mxu0 0
    %1247 = vmatpush1.bf16.msra.mxu0 0
    %1248 = vmatprep.subr.bf16.mxu0 0
    %1249 = vmatpush1.bf16.msra.mxu0 0
    %1250 = vmatprep.subr.bf16.mxu0 0
    %1251 = vmatpush1.bf16.msra.mxu0 0
    %1252 = vmatprep.subr.bf16.mxu0 0
    %1253 = vmatpush1.bf16.msra.mxu0 0
    %1254 = vmatprep.subr.bf16.mxu0 0
    %1255 = vmatpush1.bf16.msra.mxu0 0
    %1256 = vmatprep.mubr.bf16.mxu0 0
    %1257 = vmatmul.mubr.bf16.gmra.mrb[0].mxu0 %v1222
    %v1258 = vpop.f32.mrb[0].mxu0
    %v1259 = vadd.f32 0.0, %v1258
    %v1260 = vpop.f32.mrb[0].mxu0
    %v1261 = vpop.f32.mrb[0].mxu0
    %v1262 = vadd.f32 0.0, %v1261
    %v1263 = vpop.f32.mrb[0].mxu0
    %1264 = vdwg.mxu0
    %v1265 = vld [vmem:[#allocation16] sm:$0x3]
    %v1266 = vpack.c.bf16 %v1215, %v1212
    %v1267 = vpack.c.bf16 %v1262, %v1259
    %v1268 = vld [vmem:[#allocation17] sm:$0x1]
    %v1270 = vlaneseq
    %v1271 = vshrl.u32 %v1270, 7
    %v1272 = vsub.s32 0, %v1271
    %v1273 = vrot.slane %v1268, %v1272
    %v1276 = vsel %vm1070, %v1266, 0
    %v1279 = vsel %vm1070, %v1267, 0
    %vm1281 = vcmask 1041408
    %v1283 = vsel %vm1281, %v1265, 0
    %1285 = vmatprep.subr.bf16.mxu0 0
    %1286 = vmatpush1.bf16.msra.mxu0 %v1283
    %1287 = vmatprep.subr.bf16.mxu0 0
    %1288 = vmatpush1.bf16.msra.mxu0 0
    %1289 = vmatprep.subr.bf16.mxu0 0
    %1290 = vmatpush1.bf16.msra.mxu0 0
    %1291 = vmatprep.subr.bf16.mxu0 0
    %1292 = vmatpush1.bf16.msra.mxu0 0
    %1293 = vmatprep.subr.bf16.mxu0 0
    %1294 = vmatpush1.bf16.msra.mxu0 0
    %1295 = vmatprep.subr.bf16.mxu0 0
    %1296 = vmatpush1.bf16.msra.mxu0 0
    %1297 = vmatprep.subr.bf16.mxu0 0
    %1298 = vmatpush1.bf16.msra.mxu0 0
    %1299 = vmatprep.subr.bf16.mxu0 0
    %1300 = vmatpush1.bf16.msra.mxu0 0
    %1301 = vmatprep.subr.bf16.mxu0 0
    %1302 = vmatpush1.bf16.msra.mxu0 0
    %1303 = vmatprep.subr.bf16.mxu0 0
    %1304 = vmatpush1.bf16.msra.mxu0 0
    %1305 = vmatprep.subr.bf16.mxu0 0
    %1306 = vmatpush1.bf16.msra.mxu0 0
    %1307 = vmatprep.subr.bf16.mxu0 0
    %1308 = vmatpush1.bf16.msra.mxu0 0
    %1309 = vmatprep.subr.bf16.mxu0 0
    %1310 = vmatpush1.bf16.msra.mxu0 0
    %1311 = vmatprep.subr.bf16.mxu0 0
    %1312 = vmatpush1.bf16.msra.mxu0 0
    %1313 = vmatprep.subr.bf16.mxu0 0
    %1314 = vmatpush1.bf16.msra.mxu0 0
    %1315 = vmatprep.subr.bf16.mxu0 0
    %1316 = vmatpush1.bf16.msra.mxu0 0
    %1317 = vmatprep.mubr.bf16.mxu0 0
    %1318 = vmatmul.mubr.bf16.gmra.mrb[0].mxu0 %v1276
    %v1319 = vpop.f32.mrb[0].mxu0
    %v1320 = vadd.f32 %v1273, %v1319
    %v1321 = vpop.f32.mrb[0].mxu0
    %v1322 = vpop.f32.mrb[0].mxu0
    %v1323 = vadd.f32 %v1273, %v1322
    %v1324 = vpop.f32.mrb[0].mxu0
    %1325 = vmatprep.mubr.bf16.mxu0 0
    %1326 = vmatmul.mubr.bf16.gmra.mrb[0].mxu0 %v1279
    %v1327 = vpop.f32.mrb[0].mxu0
    %v1328 = vadd.f32 %v1273, %v1327
    %v1329 = vpop.f32.mrb[0].mxu0
    %v1330 = vpop.f32.mrb[0].mxu0
    %v1331 = vadd.f32 %v1273, %v1330
    %v1332 = vpop.f32.mrb[0].mxu0
    %1333 = vdwg.mxu0
    %v1334 = vsel %vm282, %v1320, 0.0
    %v1335 = vsel %vm282, %v1323, 0.0
    %v1336 = vadd.f32 %v1334, %v1335
    %v1337 = vsel %vm282, %v1328, 0.0
    %v1338 = vadd.f32 %v1336, %v1337
    %v1339 = vsel %vm282, %v1331, 0.0
    %v1340 = vadd.f32 %v1338, %v1339
    %v1341 = vrot.slane %v1340, 4
    %v1342 = vadd.f32 %v1340, %v1341
    %v1343 = vrot.slane %v1342, 2
    %v1344 = vadd.f32 %v1342, %v1343
    %v1345 = vrot.slane %v1344, 1
    %v1346 = vadd.f32 %v1344, %v1345
    %v1347 = vmul.f32 %v1320, %v1320
    %v1348 = vmul.f32 %v1323, %v1323
    %v1349 = vmul.f32 %v1328, %v1328
    %v1350 = vmul.f32 %v1331, %v1331
    %v1351 = vsel %vm282, %v1347, 0.0
    %v1352 = vsel %vm282, %v1348, 0.0
    %v1353 = vadd.f32 %v1351, %v1352
    %v1354 = vsel %vm282, %v1349, 0.0
    %v1355 = vadd.f32 %v1353, %v1354
    %v1356 = vsel %vm282, %v1350, 0.0
    %v1357 = vadd.f32 %v1355, %v1356
    %v1358 = vrot.slane %v1357, 4
    %v1359 = vadd.f32 %v1357, %v1358
    %v1360 = vrot.slane %v1359, 2
    %v1361 = vadd.f32 %v1359, %v1360
    %v1362 = vrot.slane %v1361, 1
    %v1363 = vadd.f32 %v1361, %v1362
    %v1364 = vmul.f32 %v1346, %v944
    %v1365 = vmul.f32 %v1363, %v944
    %v1366 = vmul.f32 %v1364, %v1364
    %v1367 = vsub.f32 %v1365, %v1366
    %v1368 = vmax.f32 %v1367, 0.0
    %v1369 = vadd.f32 %v1368, 1e-05
    %v1370 = vrsqrt.pop %v1369
    %v1371 = vsub.f32 %v1320, %v1364
    %v1372 = vsub.f32 %v1323, %v1364
    %v1373 = vsub.f32 %v1328, %v1364
    %v1374 = vsub.f32 %v1331, %v1364
    %v1375 = vld [vmem:[#allocation19] sm:$0x1]
    %v1376 = vmul.f32 %v1370, %v1375
    %v1377 = vlaneseq
    %v1378 = vshrl.u32 %v1377, 7
    %v1379 = vsub.s32 0, %v1378
    %v1380 = vrot.slane %v1376, %v1379
    %v1381 = vmul.f32 %v1371, %v1380
    %v1382 = vmul.f32 %v1372, %v1380
    %v1383 = vmul.f32 %v1373, %v1380
    %v1384 = vmul.f32 %v1374, %v1380
    %v1385 = vld [vmem:[#allocation20] sm:$0x1]
    %v1387 = vlaneseq
    %v1388 = vshrl.u32 %v1387, 7
    %v1389 = vsub.s32 0, %v1388
    %v1390 = vrot.slane %v1385, %v1389
    %v1392 = vadd.f32 %v1381, %v1390
    %v1393 = vadd.f32 %v1382, %v1390
    %v1394 = vadd.f32 %v1383, %v1390
    %v1395 = vadd.f32 %v1384, %v1390
    %vm1396 = vcmp.ge.s32.totalorder %v953, 24
    %v1397 = vsel %vm1396, 1, 0
    %vm1398 = vcmp.eq.s32.totalorder %v1397, 1
    %v1399 = vsel %vm1398, %v1392, 0.0
    %v1400 = vsel %vm1398, %v1393, 0.0
    %v1401 = vsel %vm1398, %v1394, 0.0
    %v1402 = vsel %vm1398, %v1395, 0.0
    %v1403 = vadd.f32 %v975, %v1399
    %v1404 = vadd.f32 %v976, %v1400
    %v1405 = vadd.f32 %v977, %v1401
    %v1406 = vadd.f32 %v978, %v1402
    %v1407 = vrot.slane %v1403, 7
    %v1408 = vrot.slane %v1405, 7
    %v1409 = vrot.slane %v1404, 7
    %v1410 = vrot.slane %v1406, 7
    %v1411 = vsel %vm342, %v1407, %v1409
    %v1412 = vsel %vm342, %v1408, %v1410
    %v1413 = vsel %vm342, %v1409, %v1407
    %v1414 = vsel %vm342, %v1410, %v1408
    %v1415 = vsel %vm351, %v1413, 0.0
    %v1416 = vsel %vm352, %v1411, 0.0
    %v1417 = vsel %vm351, %v1414, 0.0
    %v1418 = vsel %vm352, %v1412, 0.0
    %v1419 = vld [vmem:[#allocation22] sm:$0xf]
    %v1420 = vld [vmem:[#allocation22 + $0x4] sm:$0xf]
    %v1421 = vld [vmem:[#allocation22 + $0x8] sm:$0xf]
    %v1422 = vld [vmem:[#allocation22 + $0xc] sm:$0xf]
    %v1423 = vpack.c.bf16 %v1416, %v1415
    %v1424 = vpack.c.bf16 %v1418, %v1417
    %s1425 = scalar_lea.vmem [#allocation22], 16
    %v1426 = vld [vmem:[%s1425] sm:$0xf]
    %v1427 = vld [vmem:[%s1425 + $0x4] sm:$0xf]
    %v1428 = vld [vmem:[%s1425 + $0x8] sm:$0xf]
    %v1429 = vld [vmem:[%s1425 + $0xc] sm:$0xf]
    %v1430 = vpack.c.bf16 %v1404, %v1403
    %v1431 = vpack.c.bf16 %v1406, %v1405
    %v1436 = vunpack.c.l.b16 %v1426
    %v1437 = vunpack.c.l.b16 %v1427
    %v1438 = vunpack.c.l.b16 %v1428
    %v1439 = vunpack.c.l.b16 %v1429
    %v1440 = vpack.c.b16 %v1437, %v1436
    %v1441 = vpack.c.b16 %v1439, %v1438
    %v1445 = vsel %vm282, %v1430, 0
    %v1448 = vsel %vm282, %v1431, 0
    %1450 = vmatprep.subr.bf16.mxu0 0
    %1451 = vmatpush1.bf16.msra.mxu0 %v1440
    %1452 = vmatprep.subr.bf16.mxu0 0
    %1453 = vmatpush1.bf16.msra.mxu0 %v1441
    %1454 = vmatprep.subr.bf16.mxu0 0
    %1455 = vmatpush1.bf16.msra.mxu0 0
    %1456 = vmatprep.subr.bf16.mxu0 0
    %1457 = vmatpush1.bf16.msra.mxu0 0
    %1458 = vmatprep.subr.bf16.mxu0 0
    %1459 = vmatpush1.bf16.msra.mxu0 0
    %1460 = vmatprep.subr.bf16.mxu0 0
    %1461 = vmatpush1.bf16.msra.mxu0 0
    %1462 = vmatprep.subr.bf16.mxu0 0
    %1463 = vmatpush1.bf16.msra.mxu0 0
    %1464 = vmatprep.subr.bf16.mxu0 0
    %1465 = vmatpush1.bf16.msra.mxu0 0
    %1466 = vmatprep.subr.bf16.mxu0 0
    %1467 = vmatpush1.bf16.msra.mxu0 0
    %1468 = vmatprep.subr.bf16.mxu0 0
    %1469 = vmatpush1.bf16.msra.mxu0 0
    %1470 = vmatprep.subr.bf16.mxu0 0
    %1471 = vmatpush1.bf16.msra.mxu0 0
    %1472 = vmatprep.subr.bf16.mxu0 0
    %1473 = vmatpush1.bf16.msra.mxu0 0
    %1474 = vmatprep.subr.bf16.mxu0 0
    %1475 = vmatpush1.bf16.msra.mxu0 0
    %1476 = vmatprep.subr.bf16.mxu0 0
    %1477 = vmatpush1.bf16.msra.mxu0 0
    %1478 = vmatprep.subr.bf16.mxu0 0
    %1479 = vmatpush1.bf16.msra.mxu0 0
    %1480 = vmatprep.subr.bf16.mxu0 0
    %1481 = vmatpush1.bf16.msra.mxu0 0
    %1482 = vmatprep.mubr.bf16.mxu0 0
    %1483 = vmatmul.mubr.bf16.gmra.mrb[0].mxu0 %v1445
    %v1484 = vpop.f32.mrb[0].mxu0
    %v1485 = vadd.f32 0.0, %v1484
    %v1486 = vpop.f32.mrb[0].mxu0
    %v1487 = vpop.f32.mrb[0].mxu0
    %v1488 = vadd.f32 0.0, %v1487
    %v1489 = vpop.f32.mrb[0].mxu0
    %1490 = vmatprep.mubr.bf16.mxu0 0
    %1491 = vmatmul.mubr.bf16.gmra.mrb[0].mxu0 %v1448
    %v1492 = vpop.f32.mrb[0].mxu0
    %v1493 = vadd.f32 0.0, %v1492
    %v1494 = vpop.f32.mrb[0].mxu0
    %v1495 = vpop.f32.mrb[0].mxu0
    %v1496 = vadd.f32 0.0, %v1495
    %v1497 = vpop.f32.mrb[0].mxu0
    %1498 = vdwg.mxu0
    %v1503 = vunpack.c.l.b16 %v1419
    %v1504 = vunpack.c.l.b16 %v1420
    %v1505 = vunpack.c.l.b16 %v1421
    %v1506 = vunpack.c.l.b16 %v1422
    %v1507 = vpack.c.b16 %v1504, %v1503
    %v1508 = vpack.c.b16 %v1506, %v1505
    %v1512 = vsel %vm282, %v1423, 0
    %v1515 = vsel %vm282, %v1424, 0
    %1517 = vmatprep.subr.bf16.mxu0 0
    %1518 = vmatpush1.bf16.msra.mxu0 %v1507
    %1519 = vmatprep.subr.bf16.mxu0 0
    %1520 = vmatpush1.bf16.msra.mxu0 %v1508
    %1521 = vmatprep.subr.bf16.mxu0 0
    %1522 = vmatpush1.bf16.msra.mxu0 0
    %1523 = vmatprep.subr.bf16.mxu0 0
    %1524 = vmatpush1.bf16.msra.mxu0 0
    %1525 = vmatprep.subr.bf16.mxu0 0
    %1526 = vmatpush1.bf16.msra.mxu0 0
    %1527 = vmatprep.subr.bf16.mxu0 0
    %1528 = vmatpush1.bf16.msra.mxu0 0
    %1529 = vmatprep.subr.bf16.mxu0 0
    %1530 = vmatpush1.bf16.msra.mxu0 0
    %1531 = vmatprep.subr.bf16.mxu0 0
    %1532 = vmatpush1.bf16.msra.mxu0 0
    %1533 = vmatprep.subr.bf16.mxu0 0
    %1534 = vmatpush1.bf16.msra.mxu0 0
    %1535 = vmatprep.subr.bf16.mxu0 0
    %1536 = vmatpush1.bf16.msra.mxu0 0
    %1537 = vmatprep.subr.bf16.mxu0 0
    %1538 = vmatpush1.bf16.msra.mxu0 0
    %1539 = vmatprep.subr.bf16.mxu0 0
    %1540 = vmatpush1.bf16.msra.mxu0 0
    %1541 = vmatprep.subr.bf16.mxu0 0
    %1542 = vmatpush1.bf16.msra.mxu0 0
    %1543 = vmatprep.subr.bf16.mxu0 0
    %1544 = vmatpush1.bf16.msra.mxu0 0
    %1545 = vmatprep.subr.bf16.mxu0 0
    %1546 = vmatpush1.bf16.msra.mxu0 0
    %1547 = vmatprep.subr.bf16.mxu0 0
    %1548 = vmatpush1.bf16.msra.mxu0 0
    %1549 = vmatprep.mubr.bf16.mxu0 0
    %1550 = vmatmul.mubr.bf16.gmra.mrb[0].mxu0 %v1512
    %v1551 = vpop.f32.mrb[0].mxu0
    %v1552 = vadd.f32 %v1485, %v1551
    %v1553 = vpop.f32.mrb[0].mxu0
    %v1554 = vpop.f32.mrb[0].mxu0
    %v1555 = vadd.f32 %v1488, %v1554
    %v1556 = vpop.f32.mrb[0].mxu0
    %1557 = vmatprep.mubr.bf16.mxu0 0
    %1558 = vmatmul.mubr.bf16.gmra.mrb[0].mxu0 %v1515
    %v1559 = vpop.f32.mrb[0].mxu0
    %v1560 = vadd.f32 %v1493, %v1559
    %v1561 = vpop.f32.mrb[0].mxu0
    %v1562 = vpop.f32.mrb[0].mxu0
    %v1563 = vadd.f32 %v1496, %v1562
    %v1564 = vpop.f32.mrb[0].mxu0
    %1565 = vdwg.mxu0
    %v1566 = vrot.slane %v1403, 1
    %v1567 = vrot.slane %v1405, 1
    %v1568 = vrot.slane %v1404, 1
    %v1569 = vrot.slane %v1406, 1
    %v1570 = vsel %vm438, %v1566, %v1568
    %v1571 = vsel %vm438, %v1567, %v1569
    %v1572 = vsel %vm438, %v1568, %v1566
    %v1573 = vsel %vm438, %v1569, %v1567
    %v1574 = vsel %vm447, %v1570, 0.0
    %v1575 = vsel %vm448, %v1572, 0.0
    %v1576 = vsel %vm447, %v1571, 0.0
    %v1577 = vsel %vm448, %v1573, 0.0
    %s1578 = scalar_lea.vmem [#allocation22], 32
    %v1579 = vld [vmem:[%s1578] sm:$0xf]
    %v1580 = vld [vmem:[%s1578 + $0x4] sm:$0xf]
    %v1581 = vld [vmem:[%s1578 + $0x8] sm:$0xf]
    %v1582 = vld [vmem:[%s1578 + $0xc] sm:$0xf]
    %v1583 = vpack.c.bf16 %v1575, %v1574
    %v1584 = vpack.c.bf16 %v1577, %v1576
    %v1589 = vunpack.c.l.b16 %v1579
    %v1590 = vunpack.c.l.b16 %v1580
    %v1591 = vunpack.c.l.b16 %v1581
    %v1592 = vunpack.c.l.b16 %v1582
    %v1593 = vpack.c.b16 %v1590, %v1589
    %v1594 = vpack.c.b16 %v1592, %v1591
    %v1598 = vsel %vm282, %v1583, 0
    %v1601 = vsel %vm282, %v1584, 0
    %1603 = vmatprep.subr.bf16.mxu0 0
    %1604 = vmatpush1.bf16.msra.mxu0 %v1593
    %1605 = vmatprep.subr.bf16.mxu0 0
    %1606 = vmatpush1.bf16.msra.mxu0 %v1594
    %1607 = vmatprep.subr.bf16.mxu0 0
    %1608 = vmatpush1.bf16.msra.mxu0 0
    %1609 = vmatprep.subr.bf16.mxu0 0
    %1610 = vmatpush1.bf16.msra.mxu0 0
    %1611 = vmatprep.subr.bf16.mxu0 0
    %1612 = vmatpush1.bf16.msra.mxu0 0
    %1613 = vmatprep.subr.bf16.mxu0 0
    %1614 = vmatpush1.bf16.msra.mxu0 0
    %1615 = vmatprep.subr.bf16.mxu0 0
    %1616 = vmatpush1.bf16.msra.mxu0 0
    %1617 = vmatprep.subr.bf16.mxu0 0
    %1618 = vmatpush1.bf16.msra.mxu0 0
    %1619 = vmatprep.subr.bf16.mxu0 0
    %1620 = vmatpush1.bf16.msra.mxu0 0
    %1621 = vmatprep.subr.bf16.mxu0 0
    %1622 = vmatpush1.bf16.msra.mxu0 0
    %1623 = vmatprep.subr.bf16.mxu0 0
    %1624 = vmatpush1.bf16.msra.mxu0 0
    %1625 = vmatprep.subr.bf16.mxu0 0
    %1626 = vmatpush1.bf16.msra.mxu0 0
    %1627 = vmatprep.subr.bf16.mxu0 0
    %1628 = vmatpush1.bf16.msra.mxu0 0
    %1629 = vmatprep.subr.bf16.mxu0 0
    %1630 = vmatpush1.bf16.msra.mxu0 0
    %1631 = vmatprep.subr.bf16.mxu0 0
    %1632 = vmatpush1.bf16.msra.mxu0 0
    %1633 = vmatprep.subr.bf16.mxu0 0
    %1634 = vmatpush1.bf16.msra.mxu0 0
    %1635 = vmatprep.mubr.bf16.mxu0 0
    %1636 = vmatmul.mubr.bf16.gmra.mrb[0].mxu0 %v1598
    %v1637 = vpop.f32.mrb[0].mxu0
    %v1638 = vadd.f32 0.0, %v1637
    %v1639 = vpop.f32.mrb[0].mxu0
    %v1640 = vpop.f32.mrb[0].mxu0
    %v1641 = vadd.f32 0.0, %v1640
    %v1642 = vpop.f32.mrb[0].mxu0
    %1643 = vmatprep.mubr.bf16.mxu0 0
    %1644 = vmatmul.mubr.bf16.gmra.mrb[0].mxu0 %v1601
    %v1645 = vpop.f32.mrb[0].mxu0
    %v1646 = vadd.f32 0.0, %v1645
    %v1647 = vpop.f32.mrb[0].mxu0
    %v1648 = vpop.f32.mrb[0].mxu0
    %v1649 = vadd.f32 0.0, %v1648
    %v1650 = vpop.f32.mrb[0].mxu0
    %1651 = vdwg.mxu0
    %v1652 = vadd.f32 %v1552, %v1638
    %v1653 = vadd.f32 %v1555, %v1641
    %v1654 = vadd.f32 %v1560, %v1646
    %v1655 = vadd.f32 %v1563, %v1649
    %v1656 = vld [vmem:[#allocation23] sm:$0x1]
    %v1658 = vlaneseq
    %v1659 = vshrl.u32 %v1658, 7
    %v1660 = vsub.s32 0, %v1659
    %v1661 = vrot.slane %v1656, %v1660
    %v1663 = vadd.f32 %v1652, %v1661
    %v1664 = vadd.f32 %v1653, %v1661
    %v1665 = vadd.f32 %v1654, %v1661
    %v1666 = vadd.f32 %v1655, %v1661
    %v1667 = vmax.f32 %v1663, 0.0
    %v1668 = vmax.f32 %v1664, 0.0
    %v1669 = vmax.f32 %v1665, 0.0
    %v1670 = vmax.f32 %v1666, 0.0
    %v1671 = vsel %vm282, %v1667, 0.0
    %v1672 = vsel %vm282, %v1668, 0.0
    %v1673 = vadd.f32 %v1671, %v1672
    %v1674 = vsel %vm282, %v1669, 0.0
    %v1675 = vadd.f32 %v1673, %v1674
    %v1676 = vsel %vm282, %v1670, 0.0
    %v1677 = vadd.f32 %v1675, %v1676
    %v1678 = vrot.slane %v1677, 4
    %v1679 = vadd.f32 %v1677, %v1678
    %v1680 = vrot.slane %v1679, 2
    %v1681 = vadd.f32 %v1679, %v1680
    %v1682 = vrot.slane %v1681, 1
    %v1683 = vadd.f32 %v1681, %v1682
    %v1684 = vmul.f32 %v1667, %v1667
    %v1685 = vmul.f32 %v1668, %v1668
    %v1686 = vmul.f32 %v1669, %v1669
    %v1687 = vmul.f32 %v1670, %v1670
    %v1688 = vsel %vm282, %v1684, 0.0
    %v1689 = vsel %vm282, %v1685, 0.0
    %v1690 = vadd.f32 %v1688, %v1689
    %v1691 = vsel %vm282, %v1686, 0.0
    %v1692 = vadd.f32 %v1690, %v1691
    %v1693 = vsel %vm282, %v1687, 0.0
    %v1694 = vadd.f32 %v1692, %v1693
    %v1695 = vrot.slane %v1694, 4
    %v1696 = vadd.f32 %v1694, %v1695
    %v1697 = vrot.slane %v1696, 2
    %v1698 = vadd.f32 %v1696, %v1697
    %v1699 = vrot.slane %v1698, 1
    %v1700 = vadd.f32 %v1698, %v1699
    %v1701 = vmul.f32 %v1683, %v944
    %v1702 = vmul.f32 %v1700, %v944
    %v1703 = vmul.f32 %v1701, %v1701
    %v1704 = vsub.f32 %v1702, %v1703
    %v1705 = vmax.f32 %v1704, 0.0
    %v1706 = vadd.f32 %v1705, 1e-05
    %v1707 = vrsqrt.pop %v1706
    %v1708 = vsub.f32 %v1667, %v1701
    %v1709 = vsub.f32 %v1668, %v1701
    %v1710 = vsub.f32 %v1669, %v1701
    %v1711 = vsub.f32 %v1670, %v1701
    %v1712 = vld [vmem:[#allocation25] sm:$0x1]
    %v1713 = vmul.f32 %v1707, %v1712
    %v1714 = vlaneseq
    %v1715 = vshrl.u32 %v1714, 7
    %v1716 = vsub.s32 0, %v1715
    %v1717 = vrot.slane %v1713, %v1716
    %v1718 = vmul.f32 %v1708, %v1717
    %v1719 = vmul.f32 %v1709, %v1717
    %v1720 = vmul.f32 %v1710, %v1717
    %v1721 = vmul.f32 %v1711, %v1717
    %v1722 = vld [vmem:[#allocation26] sm:$0x1]
    %v1724 = vlaneseq
    %v1725 = vshrl.u32 %v1724, 7
    %v1726 = vsub.s32 0, %v1725
    %v1727 = vrot.slane %v1722, %v1726
    %v1729 = vadd.f32 %v1718, %v1727
    %v1730 = vadd.f32 %v1719, %v1727
    %v1731 = vadd.f32 %v1720, %v1727
    %v1732 = vadd.f32 %v1721, %v1727
    %v1733 = vadd.f32 %v1729, %v250
    %v1734 = vadd.f32 %v1730, %v251
    %v1735 = vadd.f32 %v1731, %v252
    %v1736 = vadd.f32 %v1732, %v253
    %1737 = vst.msk [vmem:[#allocation28] sm:$0xff] %vm282, %v1733
    %1738 = vst.msk [vmem:[#allocation28 + $0x8] sm:$0xff] %vm282, %v1734
    %1739 = vst.msk [vmem:[#allocation28 + $0x10] sm:$0xff] %vm282, %v1735
    %1740 = vst.msk [vmem:[#allocation28 + $0x18] sm:$0xff] %vm282, %v1736
    // Predicated region
    $region130: #{aggregate_forward.1} parent=1 // pred_check
      _
    $region131: #{aggregate_forward.1} parent=1 // pred_check_branch
      %1742 = sbr.rel (0) target = $region133
    $region132: #{aggregate_forward.1} parent=1 // pred_region
      %s1744 = ssub.s32 512, 512
      %1745 = vsyncadd [#allocation4], %s1744
      %s1746 = sshll.u32 [#allocation28], 4
      %s1747 = int_to_ptr.vmem [resolvable:$true] %s1746
      %1752 = dma.vmem_to_hbm [thread:$0]  %s1747, 512, %s16, [#allocation4], 128, 128, 8
    $region133: #{aggregate_forward.1} parent=1 // pred_fallthru
      _
    // Predicated region
    $region134: #{aggregate_forward.1} parent=1 // pred_check
      _
    $region135: #{aggregate_forward.1} parent=1 // pred_check_branch
      %1754 = sbr.rel (0) target = $region137
    $region136: #{aggregate_forward.1} parent=1 // pred_region
      %1755 = dma.done [#allocation4], 512
    $region137: #{aggregate_forward.1} parent=1 // pred_fallthru
      _
    %1756 = vsyncpa [#allocation3], 1
    %1757 = vsyncpa [#allocation6], 1
    %1758 = vsyncpa [#allocation9], 1
    %1759 = vsyncpa [#allocation12], 1
    %1760 = vsyncpa [#allocation15], 1
    %1761 = vsyncpa [#allocation18], 1
    %1762 = vsyncpa [#allocation21], 1
    %1763 = vsyncpa [#allocation24], 1
    %1764 = vsyncpa [#allocation27], 1
    %1765 = vsyncpa [#allocation4], 1

</llo_original>
